<compile_context>
chip_gen: v7x
topology: tpu7x:2x2x1
jax: 0.10.0
libtpu: 0.0.40
codegen_flags: <defaults>
</compile_context>

<pallas_src>
import functools
from collections import namedtuple

import jax
import jax.numpy as jnp
from jax.experimental import pallas as pl
from jax.experimental.pallas import tpu as pltpu

LossTuple = namedtuple(
    "LossTuple",
    ["rpn_reg_loss", "rpn_cls_loss", "roi_reg_loss", "roi_cls_loss", "total_loss"],
)

RPN_SIGMA = 3.0
ROI_SIGMA = 1.0
N_CLASS = 4                      # foreground classes
A = 4                            # anchors per location
IMG_C = 3
PAD_C = 8                        # input channels padded 3 -> 8; col 3 is a constant 1
FEAT_C = 32
FEAT_H = FEAT_W = 8
N_LOC = FEAT_H * FEAT_W          # 64 spatial locations
N_ANCHOR = N_LOC * A             # 256 anchors
N_ROI = 128                      # sampled RoIs
N_CLS1 = N_CLASS + 1             # 5 classes incl. background
RPN_OUT = 2 * A + 4 * A          # 24
RCNN_OUT = N_CLS1 + 4 * N_CLS1   # 25

SLAB_W = 64                      # lane width of both packed slabs
P_ROWS = PAD_C + SLAB_W + N_ROI  # 8 + 64 + 128 = 200
D_ROWS = N_LOC + N_ROI           # 64 + 128 = 192


# ----------------------- fused Pallas kernel -----------------------

def _smooth_l1(diff, sigma):
    s2 = sigma * sigma
    ad = jnp.abs(diff)
    flag = (ad < (1.0 / s2)).astype(jnp.float32)
    return flag * (0.5 * s2) * diff * diff + (1.0 - flag) * (ad - 0.5 / s2)


def _fused_train_helper_kernel(p_ref, d_ref, o_ref, *, rpn_sigma, roi_sigma):
    f32 = jnp.float32

    # --- unpack the two slabs with static slices (stay in VMEM/vregs) ---
    w_ext = p_ref[0:PAD_C, :]                               # (8, 64)
    w_head = p_ref[PAD_C:PAD_C + SLAB_W, :]                 # (64, 64)
    g = p_ref[PAD_C + SLAB_W:P_ROWS, :]                     # (128, 64) one-hot RoI gather

    d_loc = d_ref[0:N_LOC, :]                               # (64, 64) per-location data
    d_roi = d_ref[N_LOC:D_ROWS, :]                          # (128, 64) per-RoI data

    x_pad = d_loc[:, 0:PAD_C]                               # (64, 8), col 3 == 1
    pick8 = d_loc[:, 8:16]                                  # one-hot gt class on 2A lanes
    inw16 = d_loc[:, 16:32]                                 # (label > 0) on 4A lanes
    atl_t16 = d_loc[:, 32:48]                               # RPN reg targets
    onehot5 = d_roi[:, 0:N_CLS1]                            # (128, 5)
    sel20 = d_roi[:, 8:28]                                  # class-conditioned reg mask
    gt20 = d_roi[:, 32:52]                                  # RoI reg targets tiled x5

    # normalizers: one reciprocal each (pick8 / onehot5 rows sum to 1 iff valid)
    inv_rpn = 1.0 / jnp.maximum(jnp.sum(pick8), 1.0)
    inv_roi = 1.0 / jnp.maximum(jnp.sum(onehot5), 1.0)

    # --- extractor 1x1 conv; bias + constant-1 feature lane folded into w_ext ---
    feat_aug = jnp.dot(x_pad, w_ext, preferred_element_type=f32)        # (64, 64)

    # --- fused RPN + RCNN heads, biases folded in via the constant-1 feature lane.
    # output lanes: [0:8) rpn cls | [8:16) pair-swapped rpn cls | [16:32) rpn reg
    #               [32:37) rcnn cls | [40:60) rcnn per-class reg | rest zero
    heads = jnp.dot(feat_aug, w_head, preferred_element_type=f32)       # (64, 64)
    rpn_cls = heads[:, 0:2 * A]
    rpn_cls_sw = heads[:, 2 * A:4 * A]
    rpn_reg = heads[:, 4 * A:8 * A]
    rcnn_small = heads[:, 8 * A:]                                       # (64, 32)

    # --- RPN losses ---
    # 2-way cross entropy with exact per-pair max (stable; ignore_index via pick8==0)
    pmax = jnp.maximum(rpn_cls, rpn_cls_sw)
    lse = pmax + jnp.log(1.0 + jnp.exp(-jnp.abs(rpn_cls - rpn_cls_sw)))
    rpn_cls_loss = jnp.sum(pick8 * (lse - rpn_cls)) * inv_rpn
    rpn_reg_loss = jnp.sum(
        _smooth_l1(inw16 * (rpn_reg - atl_t16), rpn_sigma)) * inv_rpn

    # --- RoI gather reassociated: rcnn = G @ (feat @ W + b); exact (one-hot rows) ---
    rcnn = jnp.dot(g, rcnn_small, preferred_element_type=f32)           # (128, 32)
    rcnn_cls = rcnn[:, 0:N_CLS1]                                        # (128, 5)
    rcnn_reg = rcnn[:, 8:28]                                            # (128, 20)

    cmax = jnp.max(rcnn_cls, axis=-1, keepdims=True)
    clse = cmax + jnp.log(jnp.sum(jnp.exp(rcnn_cls - cmax), axis=-1, keepdims=True))
    picked = jnp.sum(onehot5 * rcnn_cls, axis=-1, keepdims=True)
    roi_cls_loss = jnp.sum(clse - picked) * inv_roi
    roi_reg_loss = jnp.sum(
        _smooth_l1(sel20 * (rcnn_reg - gt20), roi_sigma)) * inv_roi

    total = rpn_reg_loss + rpn_cls_loss + roi_reg_loss + roi_cls_loss
    o_ref[0, 0] = rpn_reg_loss
    o_ref[0, 1] = rpn_cls_loss
    o_ref[0, 2] = roi_reg_loss
    o_ref[0, 3] = roi_cls_loss
    o_ref[0, 4] = total
    o_ref[0, 5] = 0.0
    o_ref[0, 6] = 0.0
    o_ref[0, 7] = 0.0


# ----------------------- model params / target stubs -----------------------

def init_params(key):
    k1, k2, k3, k4, k5, k6 = jax.random.split(key, 6)
    return dict(
        w_ext=jax.random.normal(k1, (IMG_C, FEAT_C), jnp.float32) * 0.1,
        b_ext=jax.random.normal(k4, (FEAT_C,), jnp.float32) * 0.05,
        w_rpn=jax.random.normal(k2, (FEAT_C, RPN_OUT), jnp.float32) * 0.1,
        b_rpn=jax.random.normal(k5, (RPN_OUT,), jnp.float32) * 0.05,
        w_rcnn=jax.random.normal(k3, (FEAT_C, RCNN_OUT), jnp.float32) * 0.1,
        b_rcnn=jax.random.normal(k6, (RCNN_OUT,), jnp.float32) * 0.05,
    )


def _stub_targets(target_key):
    # TODO(synk): AnchorTargetLayer / ProposalTargetLayer (anchor generation, IoU
    # matching, NMS, subsampling) are data-dependent host-side logic with no clean
    # Pallas equivalent; deterministic synthetic targets stand in.
    k1, k2, k3, k4 = jax.random.split(target_key, 4)
    atl_v_label = jax.random.randint(k1, (N_ANCHOR,), -1, 2)           # {-1, 0, 1}
    atl_t_star = jax.random.normal(k2, (N_ANCHOR, 4), jnp.float32)
    ptl_gt_label = jax.random.randint(k3, (N_ROI,), 0, N_CLS1)
    ptl_t_star = jax.random.normal(k4, (N_ROI, 4), jnp.float32)
    return atl_v_label, atl_t_star, ptl_gt_label, ptl_t_star


# ----------------------- slab packing (wrapper-side, fused by XLA) -----------------------

def _pack_param_slab(params):
    f32 = jnp.float32
    # extractor weights: rows 0..2 real channels, row 3 = bias (paired with the
    # constant-1 input lane), column FEAT_C emits the constant-1 feature lane.
    w_ext_aug = jnp.zeros((PAD_C, SLAB_W), f32)
    w_ext_aug = w_ext_aug.at[:IMG_C, :FEAT_C].set(params["w_ext"])
    w_ext_aug = w_ext_aug.at[IMG_C, :FEAT_C].set(params["b_ext"])
    w_ext_aug = w_ext_aug.at[IMG_C, FEAT_C].set(1.0)

    w_rpn, b_rpn = params["w_rpn"], params["b_rpn"]        # (32, 24), (24,)
    w_rcnn, b_rcnn = params["w_rcnn"], params["b_rcnn"]    # (32, 25), (25,)
    swap = jnp.array([1, 0, 3, 2, 5, 4, 7, 6], jnp.int32)  # swap classes within each pair

    w_head = jnp.zeros((SLAB_W, SLAB_W), f32)              # row FEAT_C = bias row
    w_head = w_head.at[:FEAT_C, 0:8].set(w_rpn[:, 0:8])
    w_head = w_head.at[FEAT_C, 0:8].set(b_rpn[0:8])
    w_head = w_head.at[:FEAT_C, 8:16].set(w_rpn[:, 0:8][:, swap])
    w_head = w_head.at[FEAT_C, 8:16].set(b_rpn[0:8][swap])
    w_head = w_head.at[:FEAT_C, 16:32].set(w_rpn[:, 8:24])
    w_head = w_head.at[FEAT_C, 16:32].set(b_rpn[8:24])
    w_head = w_head.at[:FEAT_C, 32:37].set(w_rcnn[:, 0:5])
    w_head = w_head.at[FEAT_C, 32:37].set(b_rcnn[0:5])
    w_head = w_head.at[:FEAT_C, 40:60].set(w_rcnn[:, 5:25])
    w_head = w_head.at[FEAT_C, 40:60].set(b_rcnn[5:25])

    # one-hot RoI row-gather matrix for the static schedule roi_idx[i] = (7*i) % 64
    roi_idx = (7 * jnp.arange(N_ROI)) % N_LOC
    g = jax.nn.one_hot(roi_idx, N_LOC, dtype=f32)          # (128, 64)

    return jnp.concatenate([w_ext_aug, w_head, g], axis=0)  # (200, 64)


def _pack_data_slab(x_flat, atl_v_label, atl_t_star, ptl_gt_label, ptl_t_star):
    f32 = jnp.float32
    lab4 = atl_v_label.reshape(N_LOC, A)
    lab_rep2 = jnp.repeat(lab4, 2, axis=1)                           # (64, 8)
    cls_lane = (jnp.arange(2 * A) % 2)[None, :]
    pick8 = (lab_rep2 == cls_lane).astype(f32)                       # 0 for ignored (-1)
    inw16 = (jnp.repeat(lab4, 4, axis=1) > 0).astype(f32)            # (64, 16)
    atl_t16 = atl_t_star.reshape(N_LOC, 4 * A).astype(f32)           # (64, 16)

    onehot5 = jax.nn.one_hot(ptl_gt_label, N_CLS1, dtype=f32)        # (128, 5)
    fg = (ptl_gt_label > 0).astype(f32)[:, None]
    sel20 = jnp.repeat(onehot5 * fg, 4, axis=1)                      # (128, 20)
    gt20 = jnp.tile(ptl_t_star.astype(f32), (1, N_CLS1))             # (128, 20)

    d = jnp.zeros((D_ROWS, SLAB_W), f32)
    d = d.at[:N_LOC, 0:IMG_C].set(x_flat)
    d = d.at[:N_LOC, IMG_C].set(1.0)                                 # constant-1 input lane
    d = d.at[:N_LOC, 8:16].set(pick8)
    d = d.at[:N_LOC, 16:32].set(inw16)
    d = d.at[:N_LOC, 32:48].set(atl_t16)
    d = d.at[N_LOC:, 0:N_CLS1].set(onehot5)
    d = d.at[N_LOC:, 8:28].set(sel20)
    d = d.at[N_LOC:, 32:52].set(gt20)
    return d


# ----------------------- forward -----------------------

def train_helper_forward(params, img, gt_bbox, gt_label, scale, target_key):
    assert gt_bbox.shape[0] == 1, "currently only support batch size of 1."
    B, C, H, W = img.shape
    del scale  # only used by the stubbed proposal machinery

    # "extractor" stand-in: 2x2 average pool; the 1x1 conv runs inside the kernel.
    # (pool stays here: it fuses into the slab-construction ops XLA emits anyway.)
    x = jnp.transpose(img, (0, 2, 3, 1))
    x = x.reshape(B, H // 2, 2, W // 2, 2, C).mean(axis=(2, 4))      # (1, 8, 8, 3)
    x_flat = x.reshape(N_LOC, C).astype(jnp.float32)

    atl_v_label, atl_t_star, ptl_gt_label, ptl_t_star = _stub_targets(target_key)
    del gt_bbox, gt_label  # consumed only by the stubbed target layers

    p_slab = _pack_param_slab(params)
    d_slab = _pack_data_slab(x_flat, atl_v_label, atl_t_star, ptl_gt_label, ptl_t_star)

    kernel = functools.partial(
        _fused_train_helper_kernel, rpn_sigma=RPN_SIGMA, roi_sigma=ROI_SIGMA)
    vspec = pl.BlockSpec(memory_space=pltpu.MemorySpace.VMEM)
    cost = pl.CostEstimate(flops=1_150_000, transcendentals=1_800, bytes_accessed=100_500)

    out = pl.pallas_call(
        kernel,
        out_shape=jax.ShapeDtypeStruct((1, 8), jnp.float32),
        in_specs=[vspec, vspec],
        out_specs=pl.BlockSpec(memory_space=pltpu.MemorySpace.SMEM),
        cost_estimate=cost,
    )(p_slab, d_slab)

    return LossTuple(out[0, 0], out[0, 1], out[0, 2], out[0, 3], out[0, 4])


# ----------------------- plain-JAX reference (self-check) -----------------------

def _ref_reg_loss(pred, gt, label, sigma):
    s2 = sigma ** 2
    w = (label > 0).astype(jnp.float32)[:, None]
    d = w * (pred - gt)
    ad = jnp.abs(d)
    fl = (ad < 1.0 / s2).astype(jnp.float32)
    y = fl * (0.5 * s2) * d * d + (1.0 - fl) * (ad - 0.5 / s2)
    return jnp.sum(y) / jnp.maximum(jnp.sum((label >= 0).astype(jnp.float32)), 1.0)


def _ref_ce(logits, label):
    valid = label >= 0
    logp = jax.nn.log_softmax(logits, axis=-1)
    safe = jnp.where(valid, label, 0)
    nll = -jnp.take_along_axis(logp, safe[:, None], axis=1)[:, 0]
    return jnp.sum(jnp.where(valid, nll, 0.0)) / jnp.maximum(
        jnp.sum(valid.astype(jnp.float32)), 1.0)


def ref_forward(params, img, gt_bbox, gt_label, scale, target_key):
    del gt_bbox, gt_label, scale
    B, C, H, W = img.shape
    x = jnp.transpose(img, (0, 2, 3, 1)).reshape(
        B, H // 2, 2, W // 2, 2, C).mean(axis=(2, 4))
    x_flat = x.reshape(N_LOC, C)
    feat = x_flat @ params["w_ext"] + params["b_ext"][None, :]
    rpn_out = feat @ params["w_rpn"] + params["b_rpn"][None, :]
    rpn_cls = rpn_out[:, :2 * A].reshape(N_ANCHOR, 2)
    rpn_reg = rpn_out[:, 2 * A:].reshape(N_ANCHOR, 4)

    atl_v_label, atl_t_star, ptl_gt_label, ptl_t_star = _stub_targets(target_key)
    rpn_reg_loss = _ref_reg_loss(rpn_reg, atl_t_star, atl_v_label, RPN_SIGMA)
    rpn_cls_loss = _ref_ce(rpn_cls, atl_v_label)

    roi_idx = (jnp.arange(N_ROI) * 7) % N_LOC
    roi_feat = feat[roi_idx]
    rcnn_out = roi_feat @ params["w_rcnn"] + params["b_rcnn"][None, :]
    rcnn_cls = rcnn_out[:, :N_CLS1]
    rcnn_reg = rcnn_out[:, N_CLS1:].reshape(N_ROI, N_CLS1, 4)
    sample = jnp.take_along_axis(
        rcnn_reg, ptl_gt_label.reshape(-1, 1, 1), axis=1).squeeze(1)
    roi_reg_loss = _ref_reg_loss(sample, ptl_t_star, ptl_gt_label, ROI_SIGMA)
    roi_cls_loss = _ref_ce(rcnn_cls, ptl_gt_label)
    total = rpn_reg_loss + rpn_cls_loss + roi_reg_loss + roi_cls_loss
    return LossTuple(rpn_reg_loss, rpn_cls_loss, roi_reg_loss, roi_cls_loss, total)


if __name__ == "__main__":
    key = jax.random.PRNGKey(0)
    k_param, k_img, k_bbox, k_label, k_tgt = jax.random.split(key, 5)

    params = init_params(k_param)
    img = jax.random.normal(k_img, (1, IMG_C, 16, 16), jnp.float32)
    gt_bbox = jax.random.uniform(k_bbox, (1, 3, 4), jnp.float32, 0.0, 16.0)
    gt_label = jax.random.randint(k_label, (1, 3), 0, N_CLASS)
    scale = 1.0

    fwd = jax.jit(train_helper_forward)
    losses = fwd(params, img, gt_bbox, gt_label, scale, k_tgt)
    losses = jax.tree_util.tree_map(jax.block_until_ready, losses)

    # self-check: fused Pallas kernel vs plain-JAX reference forward
    ref = ref_forward(params, img, gt_bbox, gt_label, scale, k_tgt)
    for name, got, want in zip(LossTuple._fields, losses, ref):
        got_f, want_f = float(got), float(want)
        assert jnp.isfinite(got), (name, got_f)
        assert abs(got_f - want_f) < 3e-3, (name, got_f, want_f)

    print("KERNEL_OK")
</pallas_src>

<mosaic_0001>
module attributes {stable_mosaic.version = 11 : i64} {
  func.func @_fused_train_helper_kernel(%arg0: memref<200x64xf32, #tpu.memory_space<vmem>>, %arg1: memref<192x64xf32, #tpu.memory_space<vmem>>, %arg2: memref<1x8xf32, #tpu.memory_space<smem>>) attributes {dimension_semantics = [], scalar_prefetch = 0 : i64, scratch_operands = 0 : i64, tpu.core_type = #tpu.core_type<tc>} {
    %c0 = arith.constant 0 : index
    %c0_0 = arith.constant 0 : index
    %0 = vector.load %arg0[%c0, %c0_0] : memref<200x64xf32, #tpu.memory_space<vmem>>, vector<8x64xf32>
    %c8 = arith.constant 8 : index
    %c0_1 = arith.constant 0 : index
    %1 = vector.load %arg0[%c8, %c0_1] : memref<200x64xf32, #tpu.memory_space<vmem>>, vector<64x64xf32>
    %c72 = arith.constant 72 : index
    %c0_2 = arith.constant 0 : index
    %2 = vector.load %arg0[%c72, %c0_2] : memref<200x64xf32, #tpu.memory_space<vmem>>, vector<128x64xf32>
    %c0_3 = arith.constant 0 : index
    %c0_4 = arith.constant 0 : index
    %3 = vector.load %arg1[%c0_3, %c0_4] : memref<192x64xf32, #tpu.memory_space<vmem>>, vector<64x64xf32>
    %c64 = arith.constant 64 : index
    %c0_5 = arith.constant 0 : index
    %4 = vector.load %arg1[%c64, %c0_5] : memref<192x64xf32, #tpu.memory_space<vmem>>, vector<128x64xf32>
    %5 = vector.extract_strided_slice %3 {offsets = [0, 0], sizes = [64, 8], strides = [1, 1]} : vector<64x64xf32> to vector<64x8xf32>
    %6 = vector.extract_strided_slice %3 {offsets = [0, 8], sizes = [64, 8], strides = [1, 1]} : vector<64x64xf32> to vector<64x8xf32>
    %7 = vector.extract_strided_slice %3 {offsets = [0, 16], sizes = [64, 16], strides = [1, 1]} : vector<64x64xf32> to vector<64x16xf32>
    %8 = vector.extract_strided_slice %3 {offsets = [0, 32], sizes = [64, 16], strides = [1, 1]} : vector<64x64xf32> to vector<64x16xf32>
    %9 = vector.extract_strided_slice %4 {offsets = [0, 0], sizes = [128, 5], strides = [1, 1]} : vector<128x64xf32> to vector<128x5xf32>
    %10 = vector.extract_strided_slice %4 {offsets = [0, 8], sizes = [128, 20], strides = [1, 1]} : vector<128x64xf32> to vector<128x20xf32>
    %11 = vector.extract_strided_slice %4 {offsets = [0, 32], sizes = [128, 20], strides = [1, 1]} : vector<128x64xf32> to vector<128x20xf32>
    %12 = vector.shape_cast %6 : vector<64x8xf32> to vector<1x64x8xf32>
    %cst = arith.constant dense<0.000000e+00> : vector<1xf32>
    %13 = vector.multi_reduction <add>, %12, %cst [1, 2] : vector<1x64x8xf32> to vector<1xf32>
    %14 = vector.shape_cast %13 : vector<1xf32> to vector<1x1x1xf32>
    %15 = vector.extract %14[0, 0, 0] : f32 from vector<1x1x1xf32>
    %cst_6 = arith.constant 1.000000e+00 : f32
    %16 = arith.maximumf %15, %cst_6 : f32
    %cst_7 = arith.constant 1.000000e+00 : f32
    %17 = arith.divf %cst_7, %16 : f32
    %18 = vector.shape_cast %9 : vector<128x5xf32> to vector<1x128x5xf32>
    %cst_8 = arith.constant dense<0.000000e+00> : vector<1xf32>
    %19 = vector.multi_reduction <add>, %18, %cst_8 [1, 2] : vector<1x128x5xf32> to vector<1xf32>
    %20 = vector.shape_cast %19 : vector<1xf32> to vector<1x1x1xf32>
    %21 = vector.extract %20[0, 0, 0] : f32 from vector<1x1x1xf32>
    %cst_9 = arith.constant 1.000000e+00 : f32
    %22 = arith.maximumf %21, %cst_9 : f32
    %cst_10 = arith.constant 1.000000e+00 : f32
    %23 = arith.divf %cst_10, %22 : f32
    %cst_11 = arith.constant dense<0.000000e+00> : vector<64x64xf32>
    %24 = tpu.matmul %5, %0, %cst_11 {dimension_numbers = #tpu.dot_dimension_numbers<[1], [0], [0], [1], [0, 0, 1, 1], [], []>} : vector<64x8xf32>, vector<8x64xf32>, vector<64x64xf32> -> vector<64x64xf32>
    %cst_12 = arith.constant dense<0.000000e+00> : vector<64x64xf32>
    %25 = tpu.matmul %24, %1, %cst_12 {dimension_numbers = #tpu.dot_dimension_numbers<[1], [0], [0], [1], [0, 0, 1, 1], [], []>} : vector<64x64xf32>, vector<64x64xf32>, vector<64x64xf32> -> vector<64x64xf32>
    %26 = vector.extract_strided_slice %25 {offsets = [0, 0], sizes = [64, 8], strides = [1, 1]} : vector<64x64xf32> to vector<64x8xf32>
    %27 = vector.extract_strided_slice %25 {offsets = [0, 8], sizes = [64, 8], strides = [1, 1]} : vector<64x64xf32> to vector<64x8xf32>
    %28 = vector.extract_strided_slice %25 {offsets = [0, 16], sizes = [64, 16], strides = [1, 1]} : vector<64x64xf32> to vector<64x16xf32>
    %29 = vector.extract_strided_slice %25 {offsets = [0, 32], sizes = [64, 32], strides = [1, 1]} : vector<64x64xf32> to vector<64x32xf32>
    %30 = arith.maximumf %26, %27 : vector<64x8xf32>
    %31 = arith.subf %26, %27 : vector<64x8xf32>
    %32 = math.absf %31 : vector<64x8xf32>
    %cst_13 = arith.constant 0.000000e+00 : f32
    %33 = vector.broadcast %cst_13 : f32 to vector<64x8xf32>
    %34 = arith.subf %33, %32 : vector<64x8xf32>
    %35 = math.exp %34 : vector<64x8xf32>
    %cst_14 = arith.constant 1.000000e+00 : f32
    %36 = vector.broadcast %cst_14 : f32 to vector<64x8xf32>
    %37 = arith.addf %36, %35 : vector<64x8xf32>
    %38 = math.log %37 : vector<64x8xf32>
    %39 = arith.addf %30, %38 : vector<64x8xf32>
    %40 = arith.subf %39, %26 : vector<64x8xf32>
    %41 = arith.mulf %6, %40 : vector<64x8xf32>
    %42 = vector.shape_cast %41 : vector<64x8xf32> to vector<1x64x8xf32>
    %cst_15 = arith.constant dense<0.000000e+00> : vector<1xf32>
    %43 = vector.multi_reduction <add>, %42, %cst_15 [1, 2] : vector<1x64x8xf32> to vector<1xf32>
    %44 = vector.shape_cast %43 : vector<1xf32> to vector<1x1x1xf32>
    %45 = vector.extract %44[0, 0, 0] : f32 from vector<1x1x1xf32>
    %46 = arith.mulf %45, %17 : f32
    %47 = arith.subf %28, %8 : vector<64x16xf32>
    %48 = arith.mulf %7, %47 : vector<64x16xf32>
    %49 = math.absf %48 : vector<64x16xf32>
    %cst_16 = arith.constant 0.111111112 : f32
    %50 = vector.broadcast %cst_16 : f32 to vector<64x16xf32>
    %51 = arith.cmpf olt, %49, %50 : vector<64x16xf32>
    %52 = arith.extui %51 : vector<64x16xi1> to vector<64x16xi32>
    %53 = arith.sitofp %52 : vector<64x16xi32> to vector<64x16xf32>
    %cst_17 = arith.constant 4.500000e+00 : f32
    %54 = vector.broadcast %cst_17 : f32 to vector<64x16xf32>
    %55 = arith.mulf %53, %54 : vector<64x16xf32>
    %56 = arith.mulf %55, %48 : vector<64x16xf32>
    %57 = arith.mulf %56, %48 : vector<64x16xf32>
    %cst_18 = arith.constant 1.000000e+00 : f32
    %58 = vector.broadcast %cst_18 : f32 to vector<64x16xf32>
    %59 = arith.subf %58, %53 : vector<64x16xf32>
    %cst_19 = arith.constant 0.055555556 : f32
    %60 = vector.broadcast %cst_19 : f32 to vector<64x16xf32>
    %61 = arith.subf %49, %60 : vector<64x16xf32>
    %62 = arith.mulf %59, %61 : vector<64x16xf32>
    %63 = arith.addf %57, %62 : vector<64x16xf32>
    %64 = vector.shape_cast %63 : vector<64x16xf32> to vector<1x64x16xf32>
    %cst_20 = arith.constant dense<0.000000e+00> : vector<1xf32>
    %65 = vector.multi_reduction <add>, %64, %cst_20 [1, 2] : vector<1x64x16xf32> to vector<1xf32>
    %66 = vector.shape_cast %65 : vector<1xf32> to vector<1x1x1xf32>
    %67 = vector.extract %66[0, 0, 0] : f32 from vector<1x1x1xf32>
    %68 = arith.mulf %67, %17 : f32
    %cst_21 = arith.constant dense<0.000000e+00> : vector<128x32xf32>
    %69 = tpu.matmul %2, %29, %cst_21 {dimension_numbers = #tpu.dot_dimension_numbers<[1], [0], [0], [1], [0, 0, 1, 1], [], []>} : vector<128x64xf32>, vector<64x32xf32>, vector<128x32xf32> -> vector<128x32xf32>
    %70 = vector.extract_strided_slice %69 {offsets = [0, 0], sizes = [128, 5], strides = [1, 1]} : vector<128x32xf32> to vector<128x5xf32>
    %71 = vector.extract_strided_slice %69 {offsets = [0, 8], sizes = [128, 20], strides = [1, 1]} : vector<128x32xf32> to vector<128x20xf32>
    %cst_22 = arith.constant dense<0xFF800000> : vector<128xf32>
    %72 = vector.multi_reduction <maximumf>, %70, %cst_22 [1] : vector<128x5xf32> to vector<128xf32>
    %73 = vector.shape_cast %72 : vector<128xf32> to vector<128x1xf32>
    %74 = vector.broadcast %73 : vector<128x1xf32> to vector<128x5xf32>
    %75 = arith.subf %70, %74 : vector<128x5xf32>
    %76 = math.exp %75 : vector<128x5xf32>
    %cst_23 = arith.constant dense<0.000000e+00> : vector<128xf32>
    %77 = vector.multi_reduction <add>, %76, %cst_23 [1] : vector<128x5xf32> to vector<128xf32>
    %78 = vector.shape_cast %77 : vector<128xf32> to vector<128x1xf32>
    %79 = math.log %78 : vector<128x1xf32>
    %80 = arith.addf %73, %79 : vector<128x1xf32>
    %81 = arith.mulf %9, %70 : vector<128x5xf32>
    %cst_24 = arith.constant dense<0.000000e+00> : vector<128xf32>
    %82 = vector.multi_reduction <add>, %81, %cst_24 [1] : vector<128x5xf32> to vector<128xf32>
    %83 = vector.shape_cast %82 : vector<128xf32> to vector<128x1xf32>
    %84 = arith.subf %80, %83 : vector<128x1xf32>
    %85 = vector.shape_cast %84 : vector<128x1xf32> to vector<1x128x1xf32>
    %cst_25 = arith.constant dense<0.000000e+00> : vector<1xf32>
    %86 = vector.multi_reduction <add>, %85, %cst_25 [1, 2] : vector<1x128x1xf32> to vector<1xf32>
    %87 = vector.shape_cast %86 : vector<1xf32> to vector<1x1x1xf32>
    %88 = vector.extract %87[0, 0, 0] : f32 from vector<1x1x1xf32>
    %89 = arith.mulf %88, %23 : f32
    %90 = arith.subf %71, %11 : vector<128x20xf32>
    %91 = arith.mulf %10, %90 : vector<128x20xf32>
    %92 = math.absf %91 : vector<128x20xf32>
    %cst_26 = arith.constant 1.000000e+00 : f32
    %93 = vector.broadcast %cst_26 : f32 to vector<128x20xf32>
    %94 = arith.cmpf olt, %92, %93 : vector<128x20xf32>
    %95 = arith.extui %94 : vector<128x20xi1> to vector<128x20xi32>
    %96 = arith.sitofp %95 : vector<128x20xi32> to vector<128x20xf32>
    %cst_27 = arith.constant 5.000000e-01 : f32
    %97 = vector.broadcast %cst_27 : f32 to vector<128x20xf32>
    %98 = arith.mulf %96, %97 : vector<128x20xf32>
    %99 = arith.mulf %98, %91 : vector<128x20xf32>
    %100 = arith.mulf %99, %91 : vector<128x20xf32>
    %cst_28 = arith.constant 1.000000e+00 : f32
    %101 = vector.broadcast %cst_28 : f32 to vector<128x20xf32>
    %102 = arith.subf %101, %96 : vector<128x20xf32>
    %cst_29 = arith.constant 5.000000e-01 : f32
    %103 = vector.broadcast %cst_29 : f32 to vector<128x20xf32>
    %104 = arith.subf %92, %103 : vector<128x20xf32>
    %105 = arith.mulf %102, %104 : vector<128x20xf32>
    %106 = arith.addf %100, %105 : vector<128x20xf32>
    %107 = vector.shape_cast %106 : vector<128x20xf32> to vector<1x128x20xf32>
    %cst_30 = arith.constant dense<0.000000e+00> : vector<1xf32>
    %108 = vector.multi_reduction <add>, %107, %cst_30 [1, 2] : vector<1x128x20xf32> to vector<1xf32>
    %109 = vector.shape_cast %108 : vector<1xf32> to vector<1x1x1xf32>
    %110 = vector.extract %109[0, 0, 0] : f32 from vector<1x1x1xf32>
    %111 = arith.mulf %110, %23 : f32
    %112 = arith.addf %68, %46 : f32
    %113 = arith.addf %112, %111 : f32
    %114 = arith.addf %113, %89 : f32
    %c0_31 = arith.constant 0 : index
    %c0_32 = arith.constant 0 : index
    %115 = memref.load %arg2[%c0_31, %c0_32] : memref<1x8xf32, #tpu.memory_space<smem>>
    memref.store %68, %arg2[%c0_31, %c0_32] : memref<1x8xf32, #tpu.memory_space<smem>>
    %c0_33 = arith.constant 0 : index
    %c1 = arith.constant 1 : index
    %116 = memref.load %arg2[%c0_33, %c1] : memref<1x8xf32, #tpu.memory_space<smem>>
    memref.store %46, %arg2[%c0_33, %c1] : memref<1x8xf32, #tpu.memory_space<smem>>
    %c0_34 = arith.constant 0 : index
    %c2 = arith.constant 2 : index
    %117 = memref.load %arg2[%c0_34, %c2] : memref<1x8xf32, #tpu.memory_space<smem>>
    memref.store %111, %arg2[%c0_34, %c2] : memref<1x8xf32, #tpu.memory_space<smem>>
    %c0_35 = arith.constant 0 : index
    %c3 = arith.constant 3 : index
    %118 = memref.load %arg2[%c0_35, %c3] : memref<1x8xf32, #tpu.memory_space<smem>>
    memref.store %89, %arg2[%c0_35, %c3] : memref<1x8xf32, #tpu.memory_space<smem>>
    %c0_36 = arith.constant 0 : index
    %c4 = arith.constant 4 : index
    %119 = memref.load %arg2[%c0_36, %c4] : memref<1x8xf32, #tpu.memory_space<smem>>
    memref.store %114, %arg2[%c0_36, %c4] : memref<1x8xf32, #tpu.memory_space<smem>>
    %cst_37 = arith.constant 0.000000e+00 : f32
    %c0_38 = arith.constant 0 : index
    %c5 = arith.constant 5 : index
    %120 = memref.load %arg2[%c0_38, %c5] : memref<1x8xf32, #tpu.memory_space<smem>>
    memref.store %cst_37, %arg2[%c0_38, %c5] : memref<1x8xf32, #tpu.memory_space<smem>>
    %cst_39 = arith.constant 0.000000e+00 : f32
    %c0_40 = arith.constant 0 : index
    %c6 = arith.constant 6 : index
    %121 = memref.load %arg2[%c0_40, %c6] : memref<1x8xf32, #tpu.memory_space<smem>>
    memref.store %cst_39, %arg2[%c0_40, %c6] : memref<1x8xf32, #tpu.memory_space<smem>>
    %cst_41 = arith.constant 0.000000e+00 : f32
    %c0_42 = arith.constant 0 : index
    %c7 = arith.constant 7 : index
    %122 = memref.load %arg2[%c0_42, %c7] : memref<1x8xf32, #tpu.memory_space<smem>>
    memref.store %cst_41, %arg2[%c0_42, %c7] : memref<1x8xf32, #tpu.memory_space<smem>>
    return
  }
}

</mosaic_0001>

<llo_original>
// kernel: train_helper_forward.1
$region0: #{train_helper_forward.1}
  #allocation0 [shape = 'u32[]', space=smem, size = 0x4, offset = 0x4, fixed_abs, tag = 'smem constant byte address 0x4 - core index']
  #allocation1 [shape = 'u32[144,128]{1,0:T(1,128)}', space=vmem, size = 0x12000, scoped, tag = 'internal scratch']
  %s0 = inlined_call_operand.vmem [shape: f32[200,64], index: 0, kind: input, shape index: {}]
  %s1 = inlined_call_operand.vmem [shape: f32[192,64], index: 1, kind: input, shape index: {}]
  %s2 = inlined_call_operand.vmem [shape: f32[1,8], index: 2, kind: output, shape index: {}]
  %s3 = sld [smem:[#allocation0]]
  $region18: #{train_helper_forward.1} parent=0
    _
  %s5 = ssub.s32 1, %s3
  %s6 = scalar_select 0, %s5, %s3
  $region1: #{train_helper_forward.1} parent=0
    #allocation2 [shape = 'u8[512]{0}', space=smem, size = 0x200, scoped, tag = 'output window, operand 0, single buffered']
    #allocation3 [shape = 's32[1]{0}', space=sflag, size = 0x4, scoped, tag = 'scoped memory for train_helper_forward.1']
    %7 = vsyncpa [#allocation3], 0
    // Predicated region
    $region2: #{train_helper_forward.1} parent=1 // pred_check
      _
    $region3: #{train_helper_forward.1} parent=1 // pred_check_branch
      %9 = sbr.rel (0) target = $region5
    $region4: #{train_helper_forward.1} parent=1 // pred_region
      _
    $region5: #{train_helper_forward.1} parent=1 // pred_fallthru
      _
    // Predicated region
    $region6: #{train_helper_forward.1} parent=1 // pred_check
      _
    $region7: #{train_helper_forward.1} parent=1 // pred_check_branch
      %11 = sbr.rel (0) target = $region9
    $region8: #{train_helper_forward.1} parent=1 // pred_region
      _
    $region9: #{train_helper_forward.1} parent=1 // pred_fallthru
      _
    %v12 = vld [vmem:[%s0] sm:$0xff]
    %v13 = vld [vmem:[%s0 + $0x8] sm:$0xff]
    %v14 = vld [vmem:[%s0 + $0x10] sm:$0xff]
    %v15 = vld [vmem:[%s0 + $0x18] sm:$0xff]
    %v16 = vld [vmem:[%s0 + $0x20] sm:$0xff]
    %v17 = vld [vmem:[%s0 + $0x28] sm:$0xff]
    %v18 = vld [vmem:[%s0 + $0x30] sm:$0xff]
    %v19 = vld [vmem:[%s0 + $0x38] sm:$0xff]
    %v20 = vld [vmem:[%s0 + $0x40] sm:$0xff]
    %v21 = vld [vmem:[%s0 + $0x48] sm:$0xff]
    %v22 = vld [vmem:[%s0 + $0x50] sm:$0xff]
    %v23 = vld [vmem:[%s0 + $0x58] sm:$0xff]
    %v24 = vld [vmem:[%s0 + $0x60] sm:$0xff]
    %v25 = vld [vmem:[%s0 + $0x68] sm:$0xff]
    %v26 = vld [vmem:[%s0 + $0x70] sm:$0xff]
    %v27 = vld [vmem:[%s0 + $0x78] sm:$0xff]
    %v28 = vld [vmem:[%s0 + $0x80] sm:$0xff]
    %v29 = vld [vmem:[%s0 + $0x88] sm:$0xff]
    %v30 = vld [vmem:[%s0 + $0x90] sm:$0xff]
    %v31 = vld [vmem:[%s0 + $0x98] sm:$0xff]
    %v32 = vld [vmem:[%s0 + $0xa0] sm:$0xff]
    %v33 = vld [vmem:[%s0 + $0xa8] sm:$0xff]
    %v34 = vld [vmem:[%s0 + $0xb0] sm:$0xff]
    %v35 = vld [vmem:[%s0 + $0xb8] sm:$0xff]
    %v36 = vld [vmem:[%s0 + $0xc0] sm:$0xff]
    %v37 = vld [vmem:[%s1] sm:$0xff]
    %v38 = vld [vmem:[%s1 + $0x8] sm:$0xff]
    %v39 = vld [vmem:[%s1 + $0x10] sm:$0xff]
    %v40 = vld [vmem:[%s1 + $0x18] sm:$0xff]
    %v41 = vld [vmem:[%s1 + $0x20] sm:$0xff]
    %v42 = vld [vmem:[%s1 + $0x28] sm:$0xff]
    %v43 = vld [vmem:[%s1 + $0x30] sm:$0xff]
    %v44 = vld [vmem:[%s1 + $0x38] sm:$0xff]
    %v45 = vld [vmem:[%s1 + $0x40] sm:$0xff]
    %v46 = vld [vmem:[%s1 + $0x48] sm:$0xff]
    %v47 = vld [vmem:[%s1 + $0x50] sm:$0xff]
    %v48 = vld [vmem:[%s1 + $0x58] sm:$0xff]
    %v49 = vld [vmem:[%s1 + $0x60] sm:$0xff]
    %v50 = vld [vmem:[%s1 + $0x68] sm:$0xff]
    %v51 = vld [vmem:[%s1 + $0x70] sm:$0xff]
    %v52 = vld [vmem:[%s1 + $0x78] sm:$0xff]
    %v53 = vld [vmem:[%s1 + $0x80] sm:$0xff]
    %v54 = vld [vmem:[%s1 + $0x88] sm:$0xff]
    %v55 = vld [vmem:[%s1 + $0x90] sm:$0xff]
    %v56 = vld [vmem:[%s1 + $0x98] sm:$0xff]
    %v57 = vld [vmem:[%s1 + $0xa0] sm:$0xff]
    %v58 = vld [vmem:[%s1 + $0xa8] sm:$0xff]
    %v59 = vld [vmem:[%s1 + $0xb0] sm:$0xff]
    %v60 = vld [vmem:[%s1 + $0xb8] sm:$0xff]
    %69 = vrot.lane.b32.xlu0 %v37, 120
    %v70 = vpop.permute.xlu0 %69
    %71 = vrot.lane.b32.xlu0 %v38, 120
    %v72 = vpop.permute.xlu0 %71
    %73 = vrot.lane.b32.xlu0 %v39, 120
    %v74 = vpop.permute.xlu0 %73
    %75 = vrot.lane.b32.xlu0 %v40, 120
    %v76 = vpop.permute.xlu0 %75
    %77 = vrot.lane.b32.xlu0 %v41, 120
    %v78 = vpop.permute.xlu0 %77
    %79 = vrot.lane.b32.xlu0 %v42, 120
    %v80 = vpop.permute.xlu0 %79
    %81 = vrot.lane.b32.xlu0 %v43, 120
    %v82 = vpop.permute.xlu0 %81
    %83 = vrot.lane.b32.xlu0 %v44, 120
    %v84 = vpop.permute.xlu0 %83
    %vm93 = vcmask 64512
    %v94 = vsel %vm93, %v70, 0.0
    %v95 = vsel %vm93, %v72, 0.0
    %v96 = vadd.f32 %v94, %v95
    %v97 = vsel %vm93, %v74, 0.0
    %v98 = vadd.f32 %v96, %v97
    %v99 = vsel %vm93, %v76, 0.0
    %v100 = vadd.f32 %v98, %v99
    %v101 = vsel %vm93, %v78, 0.0
    %v102 = vadd.f32 %v100, %v101
    %v103 = vsel %vm93, %v80, 0.0
    %v104 = vadd.f32 %v102, %v103
    %v105 = vsel %vm93, %v82, 0.0
    %v106 = vadd.f32 %v104, %v105
    %v107 = vsel %vm93, %v84, 0.0
    %v108 = vadd.f32 %v106, %v107
    %109 = vadd.xlane.f32.xlu0 %v108
    %v110 = vpop.xlane.xlu0 %109
    %v111 = vrot.slane %v110, 4
    %v112 = vadd.f32 %v110, %v111
    %v113 = vrot.slane %v112, 2
    %v114 = vadd.f32 %v112, %v113
    %v115 = vrot.slane %v114, 1
    %v116 = vadd.f32 %v114, %v115
    %s117 = vtos %v116
    %s118 = smax.f32 %s117, 1.0
    %v119 = vstv %s118
    %v120 = vrcp.pop %v119
    %s121 = vtos %v120
    %vm122 = vcmask 39936
    %v123 = vsel %vm122, %v45, 0.0
    %v124 = vsel %vm122, %v46, 0.0
    %v125 = vadd.f32 %v123, %v124
    %v126 = vsel %vm122, %v47, 0.0
    %v127 = vadd.f32 %v125, %v126
    %v128 = vsel %vm122, %v48, 0.0
    %v129 = vadd.f32 %v127, %v128
    %v130 = vsel %vm122, %v49, 0.0
    %v131 = vadd.f32 %v129, %v130
    %v132 = vsel %vm122, %v50, 0.0
    %v133 = vadd.f32 %v131, %v132
    %v134 = vsel %vm122, %v51, 0.0
    %v135 = vadd.f32 %v133, %v134
    %v136 = vsel %vm122, %v52, 0.0
    %v137 = vadd.f32 %v135, %v136
    %v138 = vsel %vm122, %v53, 0.0
    %v139 = vadd.f32 %v137, %v138
    %v140 = vsel %vm122, %v54, 0.0
    %v141 = vadd.f32 %v139, %v140
    %v142 = vsel %vm122, %v55, 0.0
    %v143 = vadd.f32 %v141, %v142
    %v144 = vsel %vm122, %v56, 0.0
    %v145 = vadd.f32 %v143, %v144
    %v146 = vsel %vm122, %v57, 0.0
    %v147 = vadd.f32 %v145, %v146
    %v148 = vsel %vm122, %v58, 0.0
    %v149 = vadd.f32 %v147, %v148
    %v150 = vsel %vm122, %v59, 0.0
    %v151 = vadd.f32 %v149, %v150
    %v152 = vsel %vm122, %v60, 0.0
    %v153 = vadd.f32 %v151, %v152
    %154 = vadd.xlane.f32.xlu0 %v153
    %v155 = vpop.xlane.xlu0 %154
    %v156 = vrot.slane %v155, 4
    %v157 = vadd.f32 %v155, %v156
    %v158 = vrot.slane %v157, 2
    %v159 = vadd.f32 %v157, %v158
    %v160 = vrot.slane %v159, 1
    %v161 = vadd.f32 %v159, %v160
    %s162 = vtos %v161
    %s163 = smax.f32 %s162, 1.0
    %v164 = vstv %s163
    %v165 = vrcp.pop %v164
    %s166 = vtos %v165
    %v167 = vsel %vm93, %v37, 0
    %v169 = vsel %vm93, %v38, 0
    %v171 = vsel %vm93, %v39, 0
    %v173 = vsel %vm93, %v40, 0
    %v175 = vsel %vm93, %v41, 0
    %v177 = vsel %vm93, %v42, 0
    %v179 = vsel %vm93, %v43, 0
    %v181 = vsel %vm93, %v44, 0
    %183 = vmatprep.subr.mxu0 0.0
    %184 = vmatpush1.msra.mxu0 %v12
    %185 = vmatprep.subr.mxu0 0.0
    %186 = vmatpush1.msra.mxu0 0.0
    %187 = vmatprep.subr.mxu0 0.0
    %188 = vmatpush1.msra.mxu0 0.0
    %189 = vmatprep.subr.mxu0 0.0
    %190 = vmatpush1.msra.mxu0 0.0
    %191 = vmatprep.subr.mxu0 0.0
    %192 = vmatpush1.msra.mxu0 0.0
    %193 = vmatprep.subr.mxu0 0.0
    %194 = vmatpush1.msra.mxu0 0.0
    %195 = vmatprep.subr.mxu0 0.0
    %196 = vmatpush1.msra.mxu0 0.0
    %197 = vmatprep.subr.mxu0 0.0
    %198 = vmatpush1.msra.mxu0 0.0
    %199 = vmatprep.subr.mxu0 0.0
    %200 = vmatpush1.msra.mxu0 0.0
    %201 = vmatprep.subr.mxu0 0.0
    %202 = vmatpush1.msra.mxu0 0.0
    %203 = vmatprep.subr.mxu0 0.0
    %204 = vmatpush1.msra.mxu0 0.0
    %205 = vmatprep.subr.mxu0 0.0
    %206 = vmatpush1.msra.mxu0 0.0
    %207 = vmatprep.subr.mxu0 0.0
    %208 = vmatpush1.msra.mxu0 0.0
    %209 = vmatprep.subr.mxu0 0.0
    %210 = vmatpush1.msra.mxu0 0.0
    %211 = vmatprep.subr.mxu0 0.0
    %212 = vmatpush1.msra.mxu0 0.0
    %213 = vmatprep.subr.mxu0 0.0
    %214 = vmatpush1.msra.mxu0 0.0
    %215 = vmatprep.subr.mxu0 0.0
    %216 = vmatpush1.msra.mxu0 0.0
    %217 = vmatprep.subr.mxu0 0.0
    %218 = vmatpush1.msra.mxu0 0.0
    %219 = vmatprep.subr.mxu0 0.0
    %220 = vmatpush1.msra.mxu0 0.0
    %221 = vmatprep.subr.mxu0 0.0
    %222 = vmatpush1.msra.mxu0 0.0
    %223 = vmatprep.subr.mxu0 0.0
    %224 = vmatpush1.msra.mxu0 0.0
    %225 = vmatprep.subr.mxu0 0.0
    %226 = vmatpush1.msra.mxu0 0.0
    %227 = vmatprep.subr.mxu0 0.0
    %228 = vmatpush1.msra.mxu0 0.0
    %229 = vmatprep.subr.mxu0 0.0
    %230 = vmatpush1.msra.mxu0 0.0
    %231 = vmatprep.subr.mxu0 0.0
    %232 = vmatpush1.msra.mxu0 0.0
    %233 = vmatprep.subr.mxu0 0.0
    %234 = vmatpush1.msra.mxu0 0.0
    %235 = vmatprep.subr.mxu0 0.0
    %236 = vmatpush1.msra.mxu0 0.0
    %237 = vmatprep.subr.mxu0 0.0
    %238 = vmatpush1.msra.mxu0 0.0
    %239 = vmatprep.subr.mxu0 0.0
    %240 = vmatpush1.msra.mxu0 0.0
    %241 = vmatprep.subr.mxu0 0.0
    %242 = vmatpush1.msra.mxu0 0.0
    %243 = vmatprep.subr.mxu0 0.0
    %244 = vmatpush1.msra.mxu0 0.0
    %245 = vmatprep.subr.mxu0 0.0
    %246 = vmatpush1.msra.mxu0 0.0
    %247 = vmatprep.mubr.f32.mxu0 0.0
    %248 = vmatmul.mubr.f32.gmra.mrb[0].mxu0 %v167
    %v249 = vpop.f32.mrb[0].mxu0
    %v250 = vadd.f32 0.0, %v249
    %v251 = vpop.f32.mrb[0].mxu0
    %252 = vmatprep.mubr.f32.mxu0 0.0
    %253 = vmatmul.mubr.f32.gmra.mrb[0].mxu0 %v169
    %v254 = vpop.f32.mrb[0].mxu0
    %v255 = vadd.f32 0.0, %v254
    %v256 = vpop.f32.mrb[0].mxu0
    %257 = vmatprep.mubr.f32.mxu0 0.0
    %258 = vmatmul.mubr.f32.gmra.mrb[0].mxu0 %v171
    %v259 = vpop.f32.mrb[0].mxu0
    %v260 = vadd.f32 0.0, %v259
    %v261 = vpop.f32.mrb[0].mxu0
    %262 = vmatprep.mubr.f32.mxu0 0.0
    %263 = vmatmul.mubr.f32.gmra.mrb[0].mxu0 %v173
    %v264 = vpop.f32.mrb[0].mxu0
    %v265 = vadd.f32 0.0, %v264
    %v266 = vpop.f32.mrb[0].mxu0
    %267 = vmatprep.mubr.f32.mxu0 0.0
    %268 = vmatmul.mubr.f32.gmra.mrb[0].mxu0 %v175
    %v269 = vpop.f32.mrb[0].mxu0
    %v270 = vadd.f32 0.0, %v269
    %v271 = vpop.f32.mrb[0].mxu0
    %272 = vmatprep.mubr.f32.mxu0 0.0
    %273 = vmatmul.mubr.f32.gmra.mrb[0].mxu0 %v177
    %v274 = vpop.f32.mrb[0].mxu0
    %v275 = vadd.f32 0.0, %v274
    %v276 = vpop.f32.mrb[0].mxu0
    %277 = vmatprep.mubr.f32.mxu0 0.0
    %278 = vmatmul.mubr.f32.gmra.mrb[0].mxu0 %v179
    %v279 = vpop.f32.mrb[0].mxu0
    %v280 = vadd.f32 0.0, %v279
    %v281 = vpop.f32.mrb[0].mxu0
    %282 = vmatprep.mubr.f32.mxu0 0.0
    %283 = vmatmul.mubr.f32.gmra.mrb[0].mxu0 %v181
    %v284 = vpop.f32.mrb[0].mxu0
    %v285 = vadd.f32 0.0, %v284
    %v286 = vpop.f32.mrb[0].mxu0
    %287 = vdwg.mxu0
    %vm288 = vcmask 523264
    %v290 = vsel %vm288, %v250, 0
    %v293 = vsel %vm288, %v255, 0
    %v296 = vsel %vm288, %v260, 0
    %v299 = vsel %vm288, %v265, 0
    %v302 = vsel %vm288, %v270, 0
    %v305 = vsel %vm288, %v275, 0
    %v308 = vsel %vm288, %v280, 0
    %v311 = vsel %vm288, %v285, 0
    %313 = vmatprep.subr.mxu0 0.0
    %314 = vmatpush1.msra.mxu0 %v13
    %315 = vmatprep.subr.mxu0 0.0
    %316 = vmatpush1.msra.mxu0 %v14
    %317 = vmatprep.subr.mxu0 0.0
    %318 = vmatpush1.msra.mxu0 %v15
    %319 = vmatprep.subr.mxu0 0.0
    %320 = vmatpush1.msra.mxu0 %v16
    %321 = vmatprep.subr.mxu0 0.0
    %322 = vmatpush1.msra.mxu0 %v17
    %323 = vmatprep.subr.mxu0 0.0
    %324 = vmatpush1.msra.mxu0 %v18
    %325 = vmatprep.subr.mxu0 0.0
    %326 = vmatpush1.msra.mxu0 %v19
    %327 = vmatprep.subr.mxu0 0.0
    %328 = vmatpush1.msra.mxu0 %v20
    %329 = vmatprep.subr.mxu0 0.0
    %330 = vmatpush1.msra.mxu0 0.0
    %331 = vmatprep.subr.mxu0 0.0
    %332 = vmatpush1.msra.mxu0 0.0
    %333 = vmatprep.subr.mxu0 0.0
    %334 = vmatpush1.msra.mxu0 0.0
    %335 = vmatprep.subr.mxu0 0.0
    %336 = vmatpush1.msra.mxu0 0.0
    %337 = vmatprep.subr.mxu0 0.0
    %338 = vmatpush1.msra.mxu0 0.0
    %339 = vmatprep.subr.mxu0 0.0
    %340 = vmatpush1.msra.mxu0 0.0
    %341 = vmatprep.subr.mxu0 0.0
    %342 = vmatpush1.msra.mxu0 0.0
    %343 = vmatprep.subr.mxu0 0.0
    %344 = vmatpush1.msra.mxu0 0.0
    %345 = vmatprep.subr.mxu0 0.0
    %346 = vmatpush1.msra.mxu0 0.0
    %347 = vmatprep.subr.mxu0 0.0
    %348 = vmatpush1.msra.mxu0 0.0
    %349 = vmatprep.subr.mxu0 0.0
    %350 = vmatpush1.msra.mxu0 0.0
    %351 = vmatprep.subr.mxu0 0.0
    %352 = vmatpush1.msra.mxu0 0.0
    %353 = vmatprep.subr.mxu0 0.0
    %354 = vmatpush1.msra.mxu0 0.0
    %355 = vmatprep.subr.mxu0 0.0
    %356 = vmatpush1.msra.mxu0 0.0
    %357 = vmatprep.subr.mxu0 0.0
    %358 = vmatpush1.msra.mxu0 0.0
    %359 = vmatprep.subr.mxu0 0.0
    %360 = vmatpush1.msra.mxu0 0.0
    %361 = vmatprep.subr.mxu0 0.0
    %362 = vmatpush1.msra.mxu0 0.0
    %363 = vmatprep.subr.mxu0 0.0
    %364 = vmatpush1.msra.mxu0 0.0
    %365 = vmatprep.subr.mxu0 0.0
    %366 = vmatpush1.msra.mxu0 0.0
    %367 = vmatprep.subr.mxu0 0.0
    %368 = vmatpush1.msra.mxu0 0.0
    %369 = vmatprep.subr.mxu0 0.0
    %370 = vmatpush1.msra.mxu0 0.0
    %371 = vmatprep.subr.mxu0 0.0
    %372 = vmatpush1.msra.mxu0 0.0
    %373 = vmatprep.subr.mxu0 0.0
    %374 = vmatpush1.msra.mxu0 0.0
    %375 = vmatprep.subr.mxu0 0.0
    %376 = vmatpush1.msra.mxu0 0.0
    %377 = vmatprep.mubr.f32.mxu0 0.0
    %378 = vmatmul.mubr.f32.gmra.mrb[0].mxu0 %v290
    %v379 = vpop.f32.mrb[0].mxu0
    %v380 = vadd.f32 0.0, %v379
    %v381 = vpop.f32.mrb[0].mxu0
    %382 = vmatprep.mubr.f32.mxu0 0.0
    %383 = vmatmul.mubr.f32.gmra.mrb[0].mxu0 %v293
    %v384 = vpop.f32.mrb[0].mxu0
    %v385 = vadd.f32 0.0, %v384
    %v386 = vpop.f32.mrb[0].mxu0
    %387 = vmatprep.mubr.f32.mxu0 0.0
    %388 = vmatmul.mubr.f32.gmra.mrb[0].mxu0 %v296
    %v389 = vpop.f32.mrb[0].mxu0
    %v390 = vadd.f32 0.0, %v389
    %v391 = vpop.f32.mrb[0].mxu0
    %392 = vmatprep.mubr.f32.mxu0 0.0
    %393 = vmatmul.mubr.f32.gmra.mrb[0].mxu0 %v299
    %v394 = vpop.f32.mrb[0].mxu0
    %v395 = vadd.f32 0.0, %v394
    %v396 = vpop.f32.mrb[0].mxu0
    %397 = vmatprep.mubr.f32.mxu0 0.0
    %398 = vmatmul.mubr.f32.gmra.mrb[0].mxu0 %v302
    %v399 = vpop.f32.mrb[0].mxu0
    %v400 = vadd.f32 0.0, %v399
    %v401 = vpop.f32.mrb[0].mxu0
    %402 = vmatprep.mubr.f32.mxu0 0.0
    %403 = vmatmul.mubr.f32.gmra.mrb[0].mxu0 %v305
    %v404 = vpop.f32.mrb[0].mxu0
    %v405 = vadd.f32 0.0, %v404
    %v406 = vpop.f32.mrb[0].mxu0
    %407 = vmatprep.mubr.f32.mxu0 0.0
    %408 = vmatmul.mubr.f32.gmra.mrb[0].mxu0 %v308
    %v409 = vpop.f32.mrb[0].mxu0
    %v410 = vadd.f32 0.0, %v409
    %v411 = vpop.f32.mrb[0].mxu0
    %412 = vmatprep.mubr.f32.mxu0 0.0
    %413 = vmatmul.mubr.f32.gmra.mrb[0].mxu0 %v311
    %v414 = vpop.f32.mrb[0].mxu0
    %v415 = vadd.f32 0.0, %v414
    %v416 = vpop.f32.mrb[0].mxu0
    %417 = vdwg.mxu0
    %426 = vrot.lane.b32.xlu0 %v380, 120
    %v427 = vpop.permute.xlu0 %426
    %428 = vrot.lane.b32.xlu0 %v385, 120
    %v429 = vpop.permute.xlu0 %428
    %430 = vrot.lane.b32.xlu0 %v390, 120
    %v431 = vpop.permute.xlu0 %430
    %432 = vrot.lane.b32.xlu0 %v395, 120
    %v433 = vpop.permute.xlu0 %432
    %434 = vrot.lane.b32.xlu0 %v400, 120
    %v435 = vpop.permute.xlu0 %434
    %436 = vrot.lane.b32.xlu0 %v405, 120
    %v437 = vpop.permute.xlu0 %436
    %438 = vrot.lane.b32.xlu0 %v410, 120
    %v439 = vpop.permute.xlu0 %438
    %440 = vrot.lane.b32.xlu0 %v415, 120
    %v441 = vpop.permute.xlu0 %440
    %v450 = vmax.f32 %v380, %v427
    %v451 = vmax.f32 %v385, %v429
    %v452 = vmax.f32 %v390, %v431
    %v453 = vmax.f32 %v395, %v433
    %v454 = vmax.f32 %v400, %v435
    %v455 = vmax.f32 %v405, %v437
    %v456 = vmax.f32 %v410, %v439
    %v457 = vmax.f32 %v415, %v441
    %v458 = vsub.f32 %v380, %v427
    %v459 = vsub.f32 %v385, %v429
    %v460 = vsub.f32 %v390, %v431
    %v461 = vsub.f32 %v395, %v433
    %v462 = vsub.f32 %v400, %v435
    %v463 = vsub.f32 %v405, %v437
    %v464 = vsub.f32 %v410, %v439
    %v465 = vsub.f32 %v415, %v441
    %v466 = vand.u32 2147483647, %v458
    %v467 = vand.u32 2147483647, %v459
    %v468 = vand.u32 2147483647, %v460
    %v469 = vand.u32 2147483647, %v461
    %v470 = vand.u32 2147483647, %v462
    %v471 = vand.u32 2147483647, %v463
    %v472 = vand.u32 2147483647, %v464
    %v473 = vand.u32 2147483647, %v465
    %v474 = vsub.f32 0.0, %v466
    %v475 = vsub.f32 0.0, %v467
    %v476 = vsub.f32 0.0, %v468
    %v477 = vsub.f32 0.0, %v469
    %v478 = vsub.f32 0.0, %v470
    %v479 = vsub.f32 0.0, %v471
    %v480 = vsub.f32 0.0, %v472
    %v481 = vsub.f32 0.0, %v473
    %v482 = vmul.f32 %v474, 1.442695
    %v483 = vpow.pop %v482
    %v484 = vmul.f32 %v475, 1.442695
    %v485 = vpow.pop %v484
    %v486 = vmul.f32 %v476, 1.442695
    %v487 = vpow.pop %v486
    %v488 = vmul.f32 %v477, 1.442695
    %v489 = vpow.pop %v488
    %v490 = vmul.f32 %v478, 1.442695
    %v491 = vpow.pop %v490
    %v492 = vmul.f32 %v479, 1.442695
    %v493 = vpow.pop %v492
    %v494 = vmul.f32 %v480, 1.442695
    %v495 = vpow.pop %v494
    %v496 = vmul.f32 %v481, 1.442695
    %v497 = vpow.pop %v496
    %v498 = vadd.f32 %v483, 1.0
    %v499 = vadd.f32 %v485, 1.0
    %v500 = vadd.f32 %v487, 1.0
    %v501 = vadd.f32 %v489, 1.0
    %v502 = vadd.f32 %v491, 1.0
    %v503 = vadd.f32 %v493, 1.0
    %v504 = vadd.f32 %v495, 1.0
    %v505 = vadd.f32 %v497, 1.0
    %v506 = vlog2.pop %v498
    %v507 = vmul.f32 %v506, 0.6931472
    %v508 = vlog2.pop %v499
    %v509 = vmul.f32 %v508, 0.6931472
    %v510 = vlog2.pop %v500
    %v511 = vmul.f32 %v510, 0.6931472
    %v512 = vlog2.pop %v501
    %v513 = vmul.f32 %v512, 0.6931472
    %v514 = vlog2.pop %v502
    %v515 = vmul.f32 %v514, 0.6931472
    %v516 = vlog2.pop %v503
    %v517 = vmul.f32 %v516, 0.6931472
    %v518 = vlog2.pop %v504
    %v519 = vmul.f32 %v518, 0.6931472
    %v520 = vlog2.pop %v505
    %v521 = vmul.f32 %v520, 0.6931472
    %v522 = vadd.f32 %v450, %v507
    %v523 = vadd.f32 %v451, %v509
    %v524 = vadd.f32 %v452, %v511
    %v525 = vadd.f32 %v453, %v513
    %v526 = vadd.f32 %v454, %v515
    %v527 = vadd.f32 %v455, %v517
    %v528 = vadd.f32 %v456, %v519
    %v529 = vadd.f32 %v457, %v521
    %v530 = vsub.f32 %v522, %v380
    %v531 = vsub.f32 %v523, %v385
    %v532 = vsub.f32 %v524, %v390
    %v533 = vsub.f32 %v525, %v395
    %v534 = vsub.f32 %v526, %v400
    %v535 = vsub.f32 %v527, %v405
    %v536 = vsub.f32 %v528, %v410
    %v537 = vsub.f32 %v529, %v415
    %546 = vrot.lane.b32.xlu0 %v530, 8
    %v547 = vpop.permute.xlu0 %546
    %548 = vrot.lane.b32.xlu0 %v531, 8
    %v549 = vpop.permute.xlu0 %548
    %550 = vrot.lane.b32.xlu0 %v532, 8
    %v551 = vpop.permute.xlu0 %550
    %552 = vrot.lane.b32.xlu0 %v533, 8
    %v553 = vpop.permute.xlu0 %552
    %554 = vrot.lane.b32.xlu0 %v534, 8
    %v555 = vpop.permute.xlu0 %554
    %556 = vrot.lane.b32.xlu0 %v535, 8
    %v557 = vpop.permute.xlu0 %556
    %558 = vrot.lane.b32.xlu0 %v536, 8
    %v559 = vpop.permute.xlu0 %558
    %560 = vrot.lane.b32.xlu0 %v537, 8
    %v561 = vpop.permute.xlu0 %560
    %v570 = vmul.f32 %v37, %v547
    %v571 = vmul.f32 %v38, %v549
    %v572 = vmul.f32 %v39, %v551
    %v573 = vmul.f32 %v40, %v553
    %v574 = vmul.f32 %v41, %v555
    %v575 = vmul.f32 %v42, %v557
    %v576 = vmul.f32 %v43, %v559
    %v577 = vmul.f32 %v44, %v561
    %586 = vrot.lane.b32.xlu0 %v570, 120
    %v587 = vpop.permute.xlu0 %586
    %588 = vrot.lane.b32.xlu0 %v571, 120
    %v589 = vpop.permute.xlu0 %588
    %590 = vrot.lane.b32.xlu0 %v572, 120
    %v591 = vpop.permute.xlu0 %590
    %592 = vrot.lane.b32.xlu0 %v573, 120
    %v593 = vpop.permute.xlu0 %592
    %594 = vrot.lane.b32.xlu0 %v574, 120
    %v595 = vpop.permute.xlu0 %594
    %596 = vrot.lane.b32.xlu0 %v575, 120
    %v597 = vpop.permute.xlu0 %596
    %598 = vrot.lane.b32.xlu0 %v576, 120
    %v599 = vpop.permute.xlu0 %598
    %600 = vrot.lane.b32.xlu0 %v577, 120
    %v601 = vpop.permute.xlu0 %600
    %v610 = vsel %vm93, %v587, 0.0
    %v611 = vsel %vm93, %v589, 0.0
    %v612 = vadd.f32 %v610, %v611
    %v613 = vsel %vm93, %v591, 0.0
    %v614 = vadd.f32 %v612, %v613
    %v615 = vsel %vm93, %v593, 0.0
    %v616 = vadd.f32 %v614, %v615
    %v617 = vsel %vm93, %v595, 0.0
    %v618 = vadd.f32 %v616, %v617
    %v619 = vsel %vm93, %v597, 0.0
    %v620 = vadd.f32 %v618, %v619
    %v621 = vsel %vm93, %v599, 0.0
    %v622 = vadd.f32 %v620, %v621
    %v623 = vsel %vm93, %v601, 0.0
    %v624 = vadd.f32 %v622, %v623
    %625 = vadd.xlane.f32.xlu0 %v624
    %v626 = vpop.xlane.xlu0 %625
    %v627 = vrot.slane %v626, 4
    %v628 = vadd.f32 %v626, %v627
    %v629 = vrot.slane %v628, 2
    %v630 = vadd.f32 %v628, %v629
    %v631 = vrot.slane %v630, 1
    %v632 = vadd.f32 %v630, %v631
    %s633 = vtos %v632
    %s634 = smul.f32 %s633, %s121
    %635 = vrot.lane.b32.xlu0 %v37, 112
    %v636 = vpop.permute.xlu0 %635
    %637 = vrot.lane.b32.xlu0 %v38, 112
    %v638 = vpop.permute.xlu0 %637
    %639 = vrot.lane.b32.xlu0 %v39, 112
    %v640 = vpop.permute.xlu0 %639
    %641 = vrot.lane.b32.xlu0 %v40, 112
    %v642 = vpop.permute.xlu0 %641
    %643 = vrot.lane.b32.xlu0 %v41, 112
    %v644 = vpop.permute.xlu0 %643
    %645 = vrot.lane.b32.xlu0 %v42, 112
    %v646 = vpop.permute.xlu0 %645
    %647 = vrot.lane.b32.xlu0 %v43, 112
    %v648 = vpop.permute.xlu0 %647
    %649 = vrot.lane.b32.xlu0 %v44, 112
    %v650 = vpop.permute.xlu0 %649
    %v659 = vsub.f32 %v380, %v636
    %v660 = vsub.f32 %v385, %v638
    %v661 = vsub.f32 %v390, %v640
    %v662 = vsub.f32 %v395, %v642
    %v663 = vsub.f32 %v400, %v644
    %v664 = vsub.f32 %v405, %v646
    %v665 = vsub.f32 %v410, %v648
    %v666 = vsub.f32 %v415, %v650
    %v667 = vmul.f32 %v37, %v659
    %v668 = vmul.f32 %v38, %v660
    %v669 = vmul.f32 %v39, %v661
    %v670 = vmul.f32 %v40, %v662
    %v671 = vmul.f32 %v41, %v663
    %v672 = vmul.f32 %v42, %v664
    %v673 = vmul.f32 %v43, %v665
    %v674 = vmul.f32 %v44, %v666
    %v675 = vand.u32 2147483647, %v667
    %v676 = vand.u32 2147483647, %v668
    %v677 = vand.u32 2147483647, %v669
    %v678 = vand.u32 2147483647, %v670
    %v679 = vand.u32 2147483647, %v671
    %v680 = vand.u32 2147483647, %v672
    %v681 = vand.u32 2147483647, %v673
    %v682 = vand.u32 2147483647, %v674
    %vm683 = vcmp.lt.f32.partialorder %v675, 0.11111111
    %vm684 = vcmp.lt.f32.partialorder %v676, 0.11111111
    %vm685 = vcmp.lt.f32.partialorder %v677, 0.11111111
    %vm686 = vcmp.lt.f32.partialorder %v678, 0.11111111
    %vm687 = vcmp.lt.f32.partialorder %v679, 0.11111111
    %vm688 = vcmp.lt.f32.partialorder %v680, 0.11111111
    %vm689 = vcmp.lt.f32.partialorder %v681, 0.11111111
    %vm690 = vcmp.lt.f32.partialorder %v682, 0.11111111
    %v691 = vsel %vm683, 1, 0
    %v692 = vsel %vm684, 1, 0
    %v693 = vsel %vm685, 1, 0
    %v694 = vsel %vm686, 1, 0
    %v695 = vsel %vm687, 1, 0
    %v696 = vsel %vm688, 1, 0
    %v697 = vsel %vm689, 1, 0
    %v698 = vsel %vm690, 1, 0
    %v699 = vcvt.s32.f32 %v691
    %v700 = vcvt.s32.f32 %v692
    %v701 = vcvt.s32.f32 %v693
    %v702 = vcvt.s32.f32 %v694
    %v703 = vcvt.s32.f32 %v695
    %v704 = vcvt.s32.f32 %v696
    %v705 = vcvt.s32.f32 %v697
    %v706 = vcvt.s32.f32 %v698
    %v707 = vmul.f32 %v699, 4.5
    %v708 = vmul.f32 %v700, 4.5
    %v709 = vmul.f32 %v701, 4.5
    %v710 = vmul.f32 %v702, 4.5
    %v711 = vmul.f32 %v703, 4.5
    %v712 = vmul.f32 %v704, 4.5
    %v713 = vmul.f32 %v705, 4.5
    %v714 = vmul.f32 %v706, 4.5
    %v715 = vmul.f32 %v707, %v667
    %v716 = vmul.f32 %v708, %v668
    %v717 = vmul.f32 %v709, %v669
    %v718 = vmul.f32 %v710, %v670
    %v719 = vmul.f32 %v711, %v671
    %v720 = vmul.f32 %v712, %v672
    %v721 = vmul.f32 %v713, %v673
    %v722 = vmul.f32 %v714, %v674
    %v723 = vmul.f32 %v715, %v667
    %v724 = vmul.f32 %v716, %v668
    %v725 = vmul.f32 %v717, %v669
    %v726 = vmul.f32 %v718, %v670
    %v727 = vmul.f32 %v719, %v671
    %v728 = vmul.f32 %v720, %v672
    %v729 = vmul.f32 %v721, %v673
    %v730 = vmul.f32 %v722, %v674
    %v731 = vsub.f32 1.0, %v699
    %v732 = vsub.f32 1.0, %v700
    %v733 = vsub.f32 1.0, %v701
    %v734 = vsub.f32 1.0, %v702
    %v735 = vsub.f32 1.0, %v703
    %v736 = vsub.f32 1.0, %v704
    %v737 = vsub.f32 1.0, %v705
    %v738 = vsub.f32 1.0, %v706
    %v739 = vsub.f32 %v675, 0.055555556
    %v740 = vsub.f32 %v676, 0.055555556
    %v741 = vsub.f32 %v677, 0.055555556
    %v742 = vsub.f32 %v678, 0.055555556
    %v743 = vsub.f32 %v679, 0.055555556
    %v744 = vsub.f32 %v680, 0.055555556
    %v745 = vsub.f32 %v681, 0.055555556
    %v746 = vsub.f32 %v682, 0.055555556
    %v747 = vmul.f32 %v731, %v739
    %v748 = vmul.f32 %v732, %v740
    %v749 = vmul.f32 %v733, %v741
    %v750 = vmul.f32 %v734, %v742
    %v751 = vmul.f32 %v735, %v743
    %v752 = vmul.f32 %v736, %v744
    %v753 = vmul.f32 %v737, %v745
    %v754 = vmul.f32 %v738, %v746
    %v755 = vadd.f32 %v723, %v747
    %v756 = vadd.f32 %v724, %v748
    %v757 = vadd.f32 %v725, %v749
    %v758 = vadd.f32 %v726, %v750
    %v759 = vadd.f32 %v727, %v751
    %v760 = vadd.f32 %v728, %v752
    %v761 = vadd.f32 %v729, %v753
    %v762 = vadd.f32 %v730, %v754
    %771 = vrot.lane.b32.xlu0 %v755, 112
    %v772 = vpop.permute.xlu0 %771
    %773 = vrot.lane.b32.xlu0 %v756, 112
    %v774 = vpop.permute.xlu0 %773
    %775 = vrot.lane.b32.xlu0 %v757, 112
    %v776 = vpop.permute.xlu0 %775
    %777 = vrot.lane.b32.xlu0 %v758, 112
    %v778 = vpop.permute.xlu0 %777
    %779 = vrot.lane.b32.xlu0 %v759, 112
    %v780 = vpop.permute.xlu0 %779
    %781 = vrot.lane.b32.xlu0 %v760, 112
    %v782 = vpop.permute.xlu0 %781
    %783 = vrot.lane.b32.xlu0 %v761, 112
    %v784 = vpop.permute.xlu0 %783
    %785 = vrot.lane.b32.xlu0 %v762, 112
    %v786 = vpop.permute.xlu0 %785
    %vm795 = vcmask 130048
    %v796 = vsel %vm795, %v772, 0.0
    %v797 = vsel %vm795, %v774, 0.0
    %v798 = vadd.f32 %v796, %v797
    %v799 = vsel %vm795, %v776, 0.0
    %v800 = vadd.f32 %v798, %v799
    %v801 = vsel %vm795, %v778, 0.0
    %v802 = vadd.f32 %v800, %v801
    %v803 = vsel %vm795, %v780, 0.0
    %v804 = vadd.f32 %v802, %v803
    %v805 = vsel %vm795, %v782, 0.0
    %v806 = vadd.f32 %v804, %v805
    %v807 = vsel %vm795, %v784, 0.0
    %v808 = vadd.f32 %v806, %v807
    %v809 = vsel %vm795, %v786, 0.0
    %v810 = vadd.f32 %v808, %v809
    %811 = vadd.xlane.f32.xlu0 %v810
    %v812 = vpop.xlane.xlu0 %811
    %v813 = vrot.slane %v812, 4
    %v814 = vadd.f32 %v812, %v813
    %v815 = vrot.slane %v814, 2
    %v816 = vadd.f32 %v814, %v815
    %v817 = vrot.slane %v816, 1
    %v818 = vadd.f32 %v816, %v817
    %s819 = vtos %v818
    %s820 = smul.f32 %s819, %s121
    %821 = vrot.lane.b32.xlu0 %v380, 96
    %v822 = vpop.permute.xlu0 %821
    %823 = vrot.lane.b32.xlu0 %v385, 96
    %v824 = vpop.permute.xlu0 %823
    %825 = vrot.lane.b32.xlu0 %v390, 96
    %v826 = vpop.permute.xlu0 %825
    %827 = vrot.lane.b32.xlu0 %v395, 96
    %v828 = vpop.permute.xlu0 %827
    %829 = vrot.lane.b32.xlu0 %v400, 96
    %v830 = vpop.permute.xlu0 %829
    %831 = vrot.lane.b32.xlu0 %v405, 96
    %v832 = vpop.permute.xlu0 %831
    %833 = vrot.lane.b32.xlu0 %v410, 96
    %v834 = vpop.permute.xlu0 %833
    %835 = vrot.lane.b32.xlu0 %v415, 96
    %v836 = vpop.permute.xlu0 %835
    %v846 = vsel %vm288, %v21, 0
    %v849 = vsel %vm288, %v22, 0
    %v852 = vsel %vm288, %v23, 0
    %v855 = vsel %vm288, %v24, 0
    %v858 = vsel %vm288, %v25, 0
    %v861 = vsel %vm288, %v26, 0
    %v864 = vsel %vm288, %v27, 0
    %v867 = vsel %vm288, %v28, 0
    %v870 = vsel %vm288, %v29, 0
    %v873 = vsel %vm288, %v30, 0
    %v876 = vsel %vm288, %v31, 0
    %v879 = vsel %vm288, %v32, 0
    %v882 = vsel %vm288, %v33, 0
    %v885 = vsel %vm288, %v34, 0
    %v888 = vsel %vm288, %v35, 0
    %v891 = vsel %vm288, %v36, 0
    %893 = vmatprep.subr.mxu0 0.0
    %894 = vmatpush1.msra.mxu0 %v822
    %895 = vmatprep.subr.mxu0 0.0
    %896 = vmatpush1.msra.mxu0 %v824
    %897 = vmatprep.subr.mxu0 0.0
    %898 = vmatpush1.msra.mxu0 %v826
    %899 = vmatprep.subr.mxu0 0.0
    %900 = vmatpush1.msra.mxu0 %v828
    %901 = vmatprep.subr.mxu0 0.0
    %902 = vmatpush1.msra.mxu0 %v830
    %903 = vmatprep.subr.mxu0 0.0
    %904 = vmatpush1.msra.mxu0 %v832
    %905 = vmatprep.subr.mxu0 0.0
    %906 = vmatpush1.msra.mxu0 %v834
    %907 = vmatprep.subr.mxu0 0.0
    %908 = vmatpush1.msra.mxu0 %v836
    %909 = vmatprep.subr.mxu0 0.0
    %910 = vmatpush1.msra.mxu0 0.0
    %911 = vmatprep.subr.mxu0 0.0
    %912 = vmatpush1.msra.mxu0 0.0
    %913 = vmatprep.subr.mxu0 0.0
    %914 = vmatpush1.msra.mxu0 0.0
    %915 = vmatprep.subr.mxu0 0.0
    %916 = vmatpush1.msra.mxu0 0.0
    %917 = vmatprep.subr.mxu0 0.0
    %918 = vmatpush1.msra.mxu0 0.0
    %919 = vmatprep.subr.mxu0 0.0
    %920 = vmatpush1.msra.mxu0 0.0
    %921 = vmatprep.subr.mxu0 0.0
    %922 = vmatpush1.msra.mxu0 0.0
    %923 = vmatprep.subr.mxu0 0.0
    %924 = vmatpush1.msra.mxu0 0.0
    %925 = vmatprep.subr.mxu0 0.0
    %926 = vmatpush1.msra.mxu0 0.0
    %927 = vmatprep.subr.mxu0 0.0
    %928 = vmatpush1.msra.mxu0 0.0
    %929 = vmatprep.subr.mxu0 0.0
    %930 = vmatpush1.msra.mxu0 0.0
    %931 = vmatprep.subr.mxu0 0.0
    %932 = vmatpush1.msra.mxu0 0.0
    %933 = vmatprep.subr.mxu0 0.0
    %934 = vmatpush1.msra.mxu0 0.0
    %935 = vmatprep.subr.mxu0 0.0
    %936 = vmatpush1.msra.mxu0 0.0
    %937 = vmatprep.subr.mxu0 0.0
    %938 = vmatpush1.msra.mxu0 0.0
    %939 = vmatprep.subr.mxu0 0.0
    %940 = vmatpush1.msra.mxu0 0.0
    %941 = vmatprep.subr.mxu0 0.0
    %942 = vmatpush1.msra.mxu0 0.0
    %943 = vmatprep.subr.mxu0 0.0
    %944 = vmatpush1.msra.mxu0 0.0
    %945 = vmatprep.subr.mxu0 0.0
    %946 = vmatpush1.msra.mxu0 0.0
    %947 = vmatprep.subr.mxu0 0.0
    %948 = vmatpush1.msra.mxu0 0.0
    %949 = vmatprep.subr.mxu0 0.0
    %950 = vmatpush1.msra.mxu0 0.0
    %951 = vmatprep.subr.mxu0 0.0
    %952 = vmatpush1.msra.mxu0 0.0
    %953 = vmatprep.subr.mxu0 0.0
    %954 = vmatpush1.msra.mxu0 0.0
    %955 = vmatprep.subr.mxu0 0.0
    %956 = vmatpush1.msra.mxu0 0.0
    %957 = vmatprep.mubr.f32.mxu0 0.0
    %958 = vmatmul.mubr.f32.gmra.mrb[0].mxu0 %v846
    %v959 = vpop.f32.mrb[0].mxu0
    %v960 = vadd.f32 0.0, %v959
    %v961 = vpop.f32.mrb[0].mxu0
    %962 = vmatprep.mubr.f32.mxu0 0.0
    %963 = vmatmul.mubr.f32.gmra.mrb[0].mxu0 %v849
    %v964 = vpop.f32.mrb[0].mxu0
    %v965 = vadd.f32 0.0, %v964
    %v966 = vpop.f32.mrb[0].mxu0
    %967 = vmatprep.mubr.f32.mxu0 0.0
    %968 = vmatmul.mubr.f32.gmra.mrb[0].mxu0 %v852
    %v969 = vpop.f32.mrb[0].mxu0
    %v970 = vadd.f32 0.0, %v969
    %v971 = vpop.f32.mrb[0].mxu0
    %972 = vmatprep.mubr.f32.mxu0 0.0
    %973 = vmatmul.mubr.f32.gmra.mrb[0].mxu0 %v855
    %v974 = vpop.f32.mrb[0].mxu0
    %v975 = vadd.f32 0.0, %v974
    %v976 = vpop.f32.mrb[0].mxu0
    %977 = vmatprep.mubr.f32.mxu0 0.0
    %978 = vmatmul.mubr.f32.gmra.mrb[0].mxu0 %v858
    %v979 = vpop.f32.mrb[0].mxu0
    %v980 = vadd.f32 0.0, %v979
    %v981 = vpop.f32.mrb[0].mxu0
    %982 = vmatprep.mubr.f32.mxu0 0.0
    %983 = vmatmul.mubr.f32.gmra.mrb[0].mxu0 %v861
    %v984 = vpop.f32.mrb[0].mxu0
    %v985 = vadd.f32 0.0, %v984
    %v986 = vpop.f32.mrb[0].mxu0
    %987 = vmatprep.mubr.f32.mxu0 0.0
    %988 = vmatmul.mubr.f32.gmra.mrb[0].mxu0 %v864
    %v989 = vpop.f32.mrb[0].mxu0
    %v990 = vadd.f32 0.0, %v989
    %v991 = vpop.f32.mrb[0].mxu0
    %992 = vmatprep.mubr.f32.mxu0 0.0
    %993 = vmatmul.mubr.f32.gmra.mrb[0].mxu0 %v867
    %v994 = vpop.f32.mrb[0].mxu0
    %v995 = vadd.f32 0.0, %v994
    %v996 = vpop.f32.mrb[0].mxu0
    %997 = vmatprep.mubr.f32.mxu0 0.0
    %998 = vmatmul.mubr.f32.gmra.mrb[0].mxu0 %v870
    %v999 = vpop.f32.mrb[0].mxu0
    %v1000 = vadd.f32 0.0, %v999
    %v1001 = vpop.f32.mrb[0].mxu0
    %1002 = vmatprep.mubr.f32.mxu0 0.0
    %1003 = vmatmul.mubr.f32.gmra.mrb[0].mxu0 %v873
    %v1004 = vpop.f32.mrb[0].mxu0
    %v1005 = vadd.f32 0.0, %v1004
    %v1006 = vpop.f32.mrb[0].mxu0
    %1007 = vmatprep.mubr.f32.mxu0 0.0
    %1008 = vmatmul.mubr.f32.gmra.mrb[0].mxu0 %v876
    %v1009 = vpop.f32.mrb[0].mxu0
    %v1010 = vadd.f32 0.0, %v1009
    %v1011 = vpop.f32.mrb[0].mxu0
    %1012 = vmatprep.mubr.f32.mxu0 0.0
    %1013 = vmatmul.mubr.f32.gmra.mrb[0].mxu0 %v879
    %v1014 = vpop.f32.mrb[0].mxu0
    %v1015 = vadd.f32 0.0, %v1014
    %v1016 = vpop.f32.mrb[0].mxu0
    %1017 = vmatprep.mubr.f32.mxu0 0.0
    %1018 = vmatmul.mubr.f32.gmra.mrb[0].mxu0 %v882
    %v1019 = vpop.f32.mrb[0].mxu0
    %v1020 = vadd.f32 0.0, %v1019
    %v1021 = vpop.f32.mrb[0].mxu0
    %1022 = vmatprep.mubr.f32.mxu0 0.0
    %1023 = vmatmul.mubr.f32.gmra.mrb[0].mxu0 %v885
    %v1024 = vpop.f32.mrb[0].mxu0
    %v1025 = vadd.f32 0.0, %v1024
    %v1026 = vpop.f32.mrb[0].mxu0
    %1027 = vmatprep.mubr.f32.mxu0 0.0
    %1028 = vmatmul.mubr.f32.gmra.mrb[0].mxu0 %v888
    %v1029 = vpop.f32.mrb[0].mxu0
    %v1030 = vadd.f32 0.0, %v1029
    %v1031 = vpop.f32.mrb[0].mxu0
    %1032 = vmatprep.mubr.f32.mxu0 0.0
    %1033 = vmatmul.mubr.f32.gmra.mrb[0].mxu0 %v891
    %v1034 = vpop.f32.mrb[0].mxu0
    %v1035 = vadd.f32 0.0, %v1034
    %v1036 = vpop.f32.mrb[0].mxu0
    %1037 = vdwg.mxu0
    %v1038 = vsel %vm122, %v960, -inf
    %1039 = vmax.xlane.f32.xlu0 %v1038
    %v1040 = vpop.xlane.xlu0 %1039
    %v1041 = vsel %vm122, %v965, -inf
    %1042 = vmax.xlane.f32.xlu0 %v1041
    %v1043 = vpop.xlane.xlu0 %1042
    %v1044 = vsel %vm122, %v970, -inf
    %1045 = vmax.xlane.f32.xlu0 %v1044
    %v1046 = vpop.xlane.xlu0 %1045
    %v1047 = vsel %vm122, %v975, -inf
    %1048 = vmax.xlane.f32.xlu0 %v1047
    %v1049 = vpop.xlane.xlu0 %1048
    %v1050 = vsel %vm122, %v980, -inf
    %1051 = vmax.xlane.f32.xlu0 %v1050
    %v1052 = vpop.xlane.xlu0 %1051
    %v1053 = vsel %vm122, %v985, -inf
    %1054 = vmax.xlane.f32.xlu0 %v1053
    %v1055 = vpop.xlane.xlu0 %1054
    %v1056 = vsel %vm122, %v990, -inf
    %1057 = vmax.xlane.f32.xlu0 %v1056
    %v1058 = vpop.xlane.xlu0 %1057
    %v1059 = vsel %vm122, %v995, -inf
    %1060 = vmax.xlane.f32.xlu0 %v1059
    %v1061 = vpop.xlane.xlu0 %1060
    %v1062 = vsel %vm122, %v1000, -inf
    %1063 = vmax.xlane.f32.xlu0 %v1062
    %v1064 = vpop.xlane.xlu0 %1063
    %v1065 = vsel %vm122, %v1005, -inf
    %1066 = vmax.xlane.f32.xlu0 %v1065
    %v1067 = vpop.xlane.xlu0 %1066
    %v1068 = vsel %vm122, %v1010, -inf
    %1069 = vmax.xlane.f32.xlu0 %v1068
    %v1070 = vpop.xlane.xlu0 %1069
    %v1071 = vsel %vm122, %v1015, -inf
    %1072 = vmax.xlane.f32.xlu0 %v1071
    %v1073 = vpop.xlane.xlu0 %1072
    %v1074 = vsel %vm122, %v1020, -inf
    %1075 = vmax.xlane.f32.xlu0 %v1074
    %v1076 = vpop.xlane.xlu0 %1075
    %v1077 = vsel %vm122, %v1025, -inf
    %1078 = vmax.xlane.f32.xlu0 %v1077
    %v1079 = vpop.xlane.xlu0 %1078
    %v1080 = vsel %vm122, %v1030, -inf
    %1081 = vmax.xlane.f32.xlu0 %v1080
    %v1082 = vpop.xlane.xlu0 %1081
    %v1083 = vsel %vm122, %v1035, -inf
    %1084 = vmax.xlane.f32.xlu0 %v1083
    %v1085 = vpop.xlane.xlu0 %1084
    %v1086 = vsub.f32 %v960, %v1040
    %v1087 = vsub.f32 %v965, %v1043
    %v1088 = vsub.f32 %v970, %v1046
    %v1089 = vsub.f32 %v975, %v1049
    %v1090 = vsub.f32 %v980, %v1052
    %v1091 = vsub.f32 %v985, %v1055
    %v1092 = vsub.f32 %v990, %v1058
    %v1093 = vsub.f32 %v995, %v1061
    %v1094 = vsub.f32 %v1000, %v1064
    %v1095 = vsub.f32 %v1005, %v1067
    %v1096 = vsub.f32 %v1010, %v1070
    %v1097 = vsub.f32 %v1015, %v1073
    %v1098 = vsub.f32 %v1020, %v1076
    %v1099 = vsub.f32 %v1025, %v1079
    %v1100 = vsub.f32 %v1030, %v1082
    %v1101 = vsub.f32 %v1035, %v1085
    %v1102 = vmul.f32 %v1086, 1.442695
    %v1103 = vpow.pop %v1102
    %v1104 = vmul.f32 %v1087, 1.442695
    %v1105 = vpow.pop %v1104
    %v1106 = vmul.f32 %v1088, 1.442695
    %v1107 = vpow.pop %v1106
    %v1108 = vmul.f32 %v1089, 1.442695
    %v1109 = vpow.pop %v1108
    %v1110 = vmul.f32 %v1090, 1.442695
    %v1111 = vpow.pop %v1110
    %v1112 = vmul.f32 %v1091, 1.442695
    %v1113 = vpow.pop %v1112
    %v1114 = vmul.f32 %v1092, 1.442695
    %v1115 = vpow.pop %v1114
    %v1116 = vmul.f32 %v1093, 1.442695
    %v1117 = vpow.pop %v1116
    %v1118 = vmul.f32 %v1094, 1.442695
    %v1119 = vpow.pop %v1118
    %v1120 = vmul.f32 %v1095, 1.442695
    %v1121 = vpow.pop %v1120
    %v1122 = vmul.f32 %v1096, 1.442695
    %v1123 = vpow.pop %v1122
    %v1124 = vmul.f32 %v1097, 1.442695
    %v1125 = vpow.pop %v1124
    %v1126 = vmul.f32 %v1098, 1.442695
    %v1127 = vpow.pop %v1126
    %v1128 = vmul.f32 %v1099, 1.442695
    %v1129 = vpow.pop %v1128
    %v1130 = vmul.f32 %v1100, 1.442695
    %v1131 = vpow.pop %v1130
    %v1132 = vmul.f32 %v1101, 1.442695
    %v1133 = vpow.pop %v1132
    %v1134 = vsel %vm122, %v1103, 0.0
    %1135 = vadd.xlane.f32.xlu0 %v1134
    %v1136 = vpop.xlane.xlu0 %1135
    %v1137 = vsel %vm122, %v1105, 0.0
    %1138 = vadd.xlane.f32.xlu0 %v1137
    %v1139 = vpop.xlane.xlu0 %1138
    %v1140 = vsel %vm122, %v1107, 0.0
    %1141 = vadd.xlane.f32.xlu0 %v1140
    %v1142 = vpop.xlane.xlu0 %1141
    %v1143 = vsel %vm122, %v1109, 0.0
    %1144 = vadd.xlane.f32.xlu0 %v1143
    %v1145 = vpop.xlane.xlu0 %1144
    %v1146 = vsel %vm122, %v1111, 0.0
    %1147 = vadd.xlane.f32.xlu0 %v1146
    %v1148 = vpop.xlane.xlu0 %1147
    %v1149 = vsel %vm122, %v1113, 0.0
    %1150 = vadd.xlane.f32.xlu0 %v1149
    %v1151 = vpop.xlane.xlu0 %1150
    %v1152 = vsel %vm122, %v1115, 0.0
    %1153 = vadd.xlane.f32.xlu0 %v1152
    %v1154 = vpop.xlane.xlu0 %1153
    %v1155 = vsel %vm122, %v1117, 0.0
    %1156 = vadd.xlane.f32.xlu0 %v1155
    %v1157 = vpop.xlane.xlu0 %1156
    %v1158 = vsel %vm122, %v1119, 0.0
    %1159 = vadd.xlane.f32.xlu0 %v1158
    %v1160 = vpop.xlane.xlu0 %1159
    %v1161 = vsel %vm122, %v1121, 0.0
    %1162 = vadd.xlane.f32.xlu0 %v1161
    %v1163 = vpop.xlane.xlu0 %1162
    %v1164 = vsel %vm122, %v1123, 0.0
    %1165 = vadd.xlane.f32.xlu0 %v1164
    %v1166 = vpop.xlane.xlu0 %1165
    %v1167 = vsel %vm122, %v1125, 0.0
    %1168 = vadd.xlane.f32.xlu0 %v1167
    %v1169 = vpop.xlane.xlu0 %1168
    %v1170 = vsel %vm122, %v1127, 0.0
    %1171 = vadd.xlane.f32.xlu0 %v1170
    %v1172 = vpop.xlane.xlu0 %1171
    %v1173 = vsel %vm122, %v1129, 0.0
    %1174 = vadd.xlane.f32.xlu0 %v1173
    %v1175 = vpop.xlane.xlu0 %1174
    %v1176 = vsel %vm122, %v1131, 0.0
    %1177 = vadd.xlane.f32.xlu0 %v1176
    %v1178 = vpop.xlane.xlu0 %1177
    %v1179 = vsel %vm122, %v1133, 0.0
    %1180 = vadd.xlane.f32.xlu0 %v1179
    %v1181 = vpop.xlane.xlu0 %1180
    %v1182 = vlog2.pop %v1136
    %v1183 = vmul.f32 %v1182, 0.6931472
    %v1184 = vlog2.pop %v1139
    %v1185 = vmul.f32 %v1184, 0.6931472
    %v1186 = vlog2.pop %v1142
    %v1187 = vmul.f32 %v1186, 0.6931472
    %v1188 = vlog2.pop %v1145
    %v1189 = vmul.f32 %v1188, 0.6931472
    %v1190 = vlog2.pop %v1148
    %v1191 = vmul.f32 %v1190, 0.6931472
    %v1192 = vlog2.pop %v1151
    %v1193 = vmul.f32 %v1192, 0.6931472
    %v1194 = vlog2.pop %v1154
    %v1195 = vmul.f32 %v1194, 0.6931472
    %v1196 = vlog2.pop %v1157
    %v1197 = vmul.f32 %v1196, 0.6931472
    %v1198 = vlog2.pop %v1160
    %v1199 = vmul.f32 %v1198, 0.6931472
    %v1200 = vlog2.pop %v1163
    %v1201 = vmul.f32 %v1200, 0.6931472
    %v1202 = vlog2.pop %v1166
    %v1203 = vmul.f32 %v1202, 0.6931472
    %v1204 = vlog2.pop %v1169
    %v1205 = vmul.f32 %v1204, 0.6931472
    %v1206 = vlog2.pop %v1172
    %v1207 = vmul.f32 %v1206, 0.6931472
    %v1208 = vlog2.pop %v1175
    %v1209 = vmul.f32 %v1208, 0.6931472
    %v1210 = vlog2.pop %v1178
    %v1211 = vmul.f32 %v1210, 0.6931472
    %v1212 = vlog2.pop %v1181
    %v1213 = vmul.f32 %v1212, 0.6931472
    %v1214 = vadd.f32 %v1040, %v1183
    %v1215 = vadd.f32 %v1043, %v1185
    %v1216 = vadd.f32 %v1046, %v1187
    %v1217 = vadd.f32 %v1049, %v1189
    %v1218 = vadd.f32 %v1052, %v1191
    %v1219 = vadd.f32 %v1055, %v1193
    %v1220 = vadd.f32 %v1058, %v1195
    %v1221 = vadd.f32 %v1061, %v1197
    %v1222 = vadd.f32 %v1064, %v1199
    %v1223 = vadd.f32 %v1067, %v1201
    %v1224 = vadd.f32 %v1070, %v1203
    %v1225 = vadd.f32 %v1073, %v1205
    %v1226 = vadd.f32 %v1076, %v1207
    %v1227 = vadd.f32 %v1079, %v1209
    %v1228 = vadd.f32 %v1082, %v1211
    %v1229 = vadd.f32 %v1085, %v1213
    %v1230 = vmul.f32 %v45, %v960
    %v1231 = vmul.f32 %v46, %v965
    %v1232 = vmul.f32 %v47, %v970
    %v1233 = vmul.f32 %v48, %v975
    %v1234 = vmul.f32 %v49, %v980
    %v1235 = vmul.f32 %v50, %v985
    %v1236 = vmul.f32 %v51, %v990
    %v1237 = vmul.f32 %v52, %v995
    %v1238 = vmul.f32 %v53, %v1000
    %v1239 = vmul.f32 %v54, %v1005
    %v1240 = vmul.f32 %v55, %v1010
    %v1241 = vmul.f32 %v56, %v1015
    %v1242 = vmul.f32 %v57, %v1020
    %v1243 = vmul.f32 %v58, %v1025
    %v1244 = vmul.f32 %v59, %v1030
    %v1245 = vmul.f32 %v60, %v1035
    %v1246 = vsel %vm122, %v1230, 0.0
    %1247 = vadd.xlane.f32.xlu0 %v1246
    %v1248 = vpop.xlane.xlu0 %1247
    %v1249 = vsel %vm122, %v1231, 0.0
    %1250 = vadd.xlane.f32.xlu0 %v1249
    %v1251 = vpop.xlane.xlu0 %1250
    %v1252 = vsel %vm122, %v1232, 0.0
    %1253 = vadd.xlane.f32.xlu0 %v1252
    %v1254 = vpop.xlane.xlu0 %1253
    %v1255 = vsel %vm122, %v1233, 0.0
    %1256 = vadd.xlane.f32.xlu0 %v1255
    %v1257 = vpop.xlane.xlu0 %1256
    %v1258 = vsel %vm122, %v1234, 0.0
    %1259 = vadd.xlane.f32.xlu0 %v1258
    %v1260 = vpop.xlane.xlu0 %1259
    %v1261 = vsel %vm122, %v1235, 0.0
    %1262 = vadd.xlane.f32.xlu0 %v1261
    %v1263 = vpop.xlane.xlu0 %1262
    %v1264 = vsel %vm122, %v1236, 0.0
    %1265 = vadd.xlane.f32.xlu0 %v1264
    %v1266 = vpop.xlane.xlu0 %1265
    %v1267 = vsel %vm122, %v1237, 0.0
    %1268 = vadd.xlane.f32.xlu0 %v1267
    %v1269 = vpop.xlane.xlu0 %1268
    %v1270 = vsel %vm122, %v1238, 0.0
    %1271 = vadd.xlane.f32.xlu0 %v1270
    %v1272 = vpop.xlane.xlu0 %1271
    %v1273 = vsel %vm122, %v1239, 0.0
    %1274 = vadd.xlane.f32.xlu0 %v1273
    %v1275 = vpop.xlane.xlu0 %1274
    %v1276 = vsel %vm122, %v1240, 0.0
    %1277 = vadd.xlane.f32.xlu0 %v1276
    %v1278 = vpop.xlane.xlu0 %1277
    %v1279 = vsel %vm122, %v1241, 0.0
    %1280 = vadd.xlane.f32.xlu0 %v1279
    %v1281 = vpop.xlane.xlu0 %1280
    %v1282 = vsel %vm122, %v1242, 0.0
    %1283 = vadd.xlane.f32.xlu0 %v1282
    %v1284 = vpop.xlane.xlu0 %1283
    %v1285 = vsel %vm122, %v1243, 0.0
    %1286 = vadd.xlane.f32.xlu0 %v1285
    %v1287 = vpop.xlane.xlu0 %1286
    %v1288 = vsel %vm122, %v1244, 0.0
    %1289 = vadd.xlane.f32.xlu0 %v1288
    %v1290 = vpop.xlane.xlu0 %1289
    %v1291 = vsel %vm122, %v1245, 0.0
    %1292 = vadd.xlane.f32.xlu0 %v1291
    %v1293 = vpop.xlane.xlu0 %1292
    %v1294 = vsub.f32 %v1214, %v1248
    %v1295 = vsub.f32 %v1215, %v1251
    %v1296 = vsub.f32 %v1216, %v1254
    %v1297 = vsub.f32 %v1217, %v1257
    %v1298 = vsub.f32 %v1218, %v1260
    %v1299 = vsub.f32 %v1219, %v1263
    %v1300 = vsub.f32 %v1220, %v1266
    %v1301 = vsub.f32 %v1221, %v1269
    %v1302 = vsub.f32 %v1222, %v1272
    %v1303 = vsub.f32 %v1223, %v1275
    %v1304 = vsub.f32 %v1224, %v1278
    %v1305 = vsub.f32 %v1225, %v1281
    %v1306 = vsub.f32 %v1226, %v1284
    %v1307 = vsub.f32 %v1227, %v1287
    %v1308 = vsub.f32 %v1228, %v1290
    %v1309 = vsub.f32 %v1229, %v1293
    %vm1310 = vcmask 7168
    %v1311 = vsel %vm1310, %v1294, 0.0
    %v1312 = vsel %vm1310, %v1295, 0.0
    %v1313 = vadd.f32 %v1311, %v1312
    %v1314 = vsel %vm1310, %v1296, 0.0
    %v1315 = vadd.f32 %v1313, %v1314
    %v1316 = vsel %vm1310, %v1297, 0.0
    %v1317 = vadd.f32 %v1315, %v1316
    %v1318 = vsel %vm1310, %v1298, 0.0
    %v1319 = vadd.f32 %v1317, %v1318
    %v1320 = vsel %vm1310, %v1299, 0.0
    %v1321 = vadd.f32 %v1319, %v1320
    %v1322 = vsel %vm1310, %v1300, 0.0
    %v1323 = vadd.f32 %v1321, %v1322
    %v1324 = vsel %vm1310, %v1301, 0.0
    %v1325 = vadd.f32 %v1323, %v1324
    %v1326 = vsel %vm1310, %v1302, 0.0
    %v1327 = vadd.f32 %v1325, %v1326
    %v1328 = vsel %vm1310, %v1303, 0.0
    %v1329 = vadd.f32 %v1327, %v1328
    %v1330 = vsel %vm1310, %v1304, 0.0
    %v1331 = vadd.f32 %v1329, %v1330
    %v1332 = vsel %vm1310, %v1305, 0.0
    %v1333 = vadd.f32 %v1331, %v1332
    %v1334 = vsel %vm1310, %v1306, 0.0
    %v1335 = vadd.f32 %v1333, %v1334
    %v1336 = vsel %vm1310, %v1307, 0.0
    %v1337 = vadd.f32 %v1335, %v1336
    %v1338 = vsel %vm1310, %v1308, 0.0
    %v1339 = vadd.f32 %v1337, %v1338
    %v1340 = vsel %vm1310, %v1309, 0.0
    %v1341 = vadd.f32 %v1339, %v1340
    %1342 = vadd.xlane.f32.xlu0 %v1341
    %v1343 = vpop.xlane.xlu0 %1342
    %v1344 = vrot.slane %v1343, 4
    %v1345 = vadd.f32 %v1343, %v1344
    %v1346 = vrot.slane %v1345, 2
    %v1347 = vadd.f32 %v1345, %v1346
    %v1348 = vrot.slane %v1347, 1
    %v1349 = vadd.f32 %v1347, %v1348
    %s1350 = vtos %v1349
    %s1351 = smul.f32 %s1350, %s166
    %1368 = vrot.lane.b32.xlu0 %v45, 104
    %v1369 = vpop.permute.xlu0 %1368
    %1370 = vrot.lane.b32.xlu0 %v46, 104
    %v1371 = vpop.permute.xlu0 %1370
    %1372 = vrot.lane.b32.xlu0 %v47, 104
    %v1373 = vpop.permute.xlu0 %1372
    %1374 = vrot.lane.b32.xlu0 %v48, 104
    %v1375 = vpop.permute.xlu0 %1374
    %1376 = vrot.lane.b32.xlu0 %v49, 104
    %v1377 = vpop.permute.xlu0 %1376
    %1378 = vrot.lane.b32.xlu0 %v50, 104
    %v1379 = vpop.permute.xlu0 %1378
    %1380 = vrot.lane.b32.xlu0 %v51, 104
    %v1381 = vpop.permute.xlu0 %1380
    %1382 = vrot.lane.b32.xlu0 %v52, 104
    %v1383 = vpop.permute.xlu0 %1382
    %1384 = vrot.lane.b32.xlu0 %v53, 104
    %v1385 = vpop.permute.xlu0 %1384
    %1386 = vrot.lane.b32.xlu0 %v54, 104
    %v1387 = vpop.permute.xlu0 %1386
    %1388 = vrot.lane.b32.xlu0 %v55, 104
    %v1389 = vpop.permute.xlu0 %1388
    %1390 = vrot.lane.b32.xlu0 %v56, 104
    %v1391 = vpop.permute.xlu0 %1390
    %1392 = vrot.lane.b32.xlu0 %v57, 104
    %v1393 = vpop.permute.xlu0 %1392
    %1394 = vrot.lane.b32.xlu0 %v58, 104
    %v1395 = vpop.permute.xlu0 %1394
    %1396 = vrot.lane.b32.xlu0 %v59, 104
    %v1397 = vpop.permute.xlu0 %1396
    %1398 = vrot.lane.b32.xlu0 %v60, 104
    %v1399 = vpop.permute.xlu0 %1398
    %v1416 = vsub.f32 %v960, %v1369
    %v1417 = vsub.f32 %v965, %v1371
    %v1418 = vsub.f32 %v970, %v1373
    %v1419 = vsub.f32 %v975, %v1375
    %v1420 = vsub.f32 %v980, %v1377
    %v1421 = vsub.f32 %v985, %v1379
    %v1422 = vsub.f32 %v990, %v1381
    %v1423 = vsub.f32 %v995, %v1383
    %v1424 = vsub.f32 %v1000, %v1385
    %v1425 = vsub.f32 %v1005, %v1387
    %v1426 = vsub.f32 %v1010, %v1389
    %v1427 = vsub.f32 %v1015, %v1391
    %v1428 = vsub.f32 %v1020, %v1393
    %v1429 = vsub.f32 %v1025, %v1395
    %v1430 = vsub.f32 %v1030, %v1397
    %v1431 = vsub.f32 %v1035, %v1399
    %v1432 = vmul.f32 %v45, %v1416
    %v1433 = vmul.f32 %v46, %v1417
    %v1434 = vmul.f32 %v47, %v1418
    %v1435 = vmul.f32 %v48, %v1419
    %v1436 = vmul.f32 %v49, %v1420
    %v1437 = vmul.f32 %v50, %v1421
    %v1438 = vmul.f32 %v51, %v1422
    %v1439 = vmul.f32 %v52, %v1423
    %v1440 = vmul.f32 %v53, %v1424
    %v1441 = vmul.f32 %v54, %v1425
    %v1442 = vmul.f32 %v55, %v1426
    %v1443 = vmul.f32 %v56, %v1427
    %v1444 = vmul.f32 %v57, %v1428
    %v1445 = vmul.f32 %v58, %v1429
    %v1446 = vmul.f32 %v59, %v1430
    %v1447 = vmul.f32 %v60, %v1431
    %v1448 = vand.u32 2147483647, %v1432
    %v1449 = vand.u32 2147483647, %v1433
    %v1450 = vand.u32 2147483647, %v1434
    %v1451 = vand.u32 2147483647, %v1435
    %v1452 = vand.u32 2147483647, %v1436
    %v1453 = vand.u32 2147483647, %v1437
    %v1454 = vand.u32 2147483647, %v1438
    %v1455 = vand.u32 2147483647, %v1439
    %v1456 = vand.u32 2147483647, %v1440
    %v1457 = vand.u32 2147483647, %v1441
    %v1458 = vand.u32 2147483647, %v1442
    %v1459 = vand.u32 2147483647, %v1443
    %v1460 = vand.u32 2147483647, %v1444
    %v1461 = vand.u32 2147483647, %v1445
    %v1462 = vand.u32 2147483647, %v1446
    %v1463 = vand.u32 2147483647, %v1447
    %vm1464 = vcmp.lt.f32.partialorder %v1448, 1.0
    %vm1465 = vcmp.lt.f32.partialorder %v1449, 1.0
    %vm1466 = vcmp.lt.f32.partialorder %v1450, 1.0
    %vm1467 = vcmp.lt.f32.partialorder %v1451, 1.0
    %vm1468 = vcmp.lt.f32.partialorder %v1452, 1.0
    %vm1469 = vcmp.lt.f32.partialorder %v1453, 1.0
    %vm1470 = vcmp.lt.f32.partialorder %v1454, 1.0
    %vm1471 = vcmp.lt.f32.partialorder %v1455, 1.0
    %vm1472 = vcmp.lt.f32.partialorder %v1456, 1.0
    %vm1473 = vcmp.lt.f32.partialorder %v1457, 1.0
    %vm1474 = vcmp.lt.f32.partialorder %v1458, 1.0
    %vm1475 = vcmp.lt.f32.partialorder %v1459, 1.0
    %vm1476 = vcmp.lt.f32.partialorder %v1460, 1.0
    %vm1477 = vcmp.lt.f32.partialorder %v1461, 1.0
    %vm1478 = vcmp.lt.f32.partialorder %v1462, 1.0
    %vm1479 = vcmp.lt.f32.partialorder %v1463, 1.0
    %v1480 = vsel %vm1464, 1, 0
    %v1481 = vsel %vm1465, 1, 0
    %v1482 = vsel %vm1466, 1, 0
    %v1483 = vsel %vm1467, 1, 0
    %v1484 = vsel %vm1468, 1, 0
    %v1485 = vsel %vm1469, 1, 0
    %v1486 = vsel %vm1470, 1, 0
    %v1487 = vsel %vm1471, 1, 0
    %v1488 = vsel %vm1472, 1, 0
    %v1489 = vsel %vm1473, 1, 0
    %v1490 = vsel %vm1474, 1, 0
    %v1491 = vsel %vm1475, 1, 0
    %v1492 = vsel %vm1476, 1, 0
    %v1493 = vsel %vm1477, 1, 0
    %v1494 = vsel %vm1478, 1, 0
    %v1495 = vsel %vm1479, 1, 0
    %v1496 = vcvt.s32.f32 %v1480
    %v1497 = vcvt.s32.f32 %v1481
    %v1498 = vcvt.s32.f32 %v1482
    %v1499 = vcvt.s32.f32 %v1483
    %v1500 = vcvt.s32.f32 %v1484
    %v1501 = vcvt.s32.f32 %v1485
    %v1502 = vcvt.s32.f32 %v1486
    %v1503 = vcvt.s32.f32 %v1487
    %v1504 = vcvt.s32.f32 %v1488
    %v1505 = vcvt.s32.f32 %v1489
    %v1506 = vcvt.s32.f32 %v1490
    %v1507 = vcvt.s32.f32 %v1491
    %v1508 = vcvt.s32.f32 %v1492
    %v1509 = vcvt.s32.f32 %v1493
    %v1510 = vcvt.s32.f32 %v1494
    %v1511 = vcvt.s32.f32 %v1495
    %v1512 = vmul.f32 %v1496, 0.5
    %v1513 = vmul.f32 %v1497, 0.5
    %v1514 = vmul.f32 %v1498, 0.5
    %v1515 = vmul.f32 %v1499, 0.5
    %v1516 = vmul.f32 %v1500, 0.5
    %v1517 = vmul.f32 %v1501, 0.5
    %v1518 = vmul.f32 %v1502, 0.5
    %v1519 = vmul.f32 %v1503, 0.5
    %v1520 = vmul.f32 %v1504, 0.5
    %v1521 = vmul.f32 %v1505, 0.5
    %v1522 = vmul.f32 %v1506, 0.5
    %v1523 = vmul.f32 %v1507, 0.5
    %v1524 = vmul.f32 %v1508, 0.5
    %v1525 = vmul.f32 %v1509, 0.5
    %v1526 = vmul.f32 %v1510, 0.5
    %v1527 = vmul.f32 %v1511, 0.5
    %v1528 = vmul.f32 %v1512, %v1432
    %v1529 = vmul.f32 %v1513, %v1433
    %v1530 = vmul.f32 %v1514, %v1434
    %v1531 = vmul.f32 %v1515, %v1435
    %v1532 = vmul.f32 %v1516, %v1436
    %v1533 = vmul.f32 %v1517, %v1437
    %v1534 = vmul.f32 %v1518, %v1438
    %v1535 = vmul.f32 %v1519, %v1439
    %v1536 = vmul.f32 %v1520, %v1440
    %v1537 = vmul.f32 %v1521, %v1441
    %v1538 = vmul.f32 %v1522, %v1442
    %v1539 = vmul.f32 %v1523, %v1443
    %v1540 = vmul.f32 %v1524, %v1444
    %v1541 = vmul.f32 %v1525, %v1445
    %v1542 = vmul.f32 %v1526, %v1446
    %v1543 = vmul.f32 %v1527, %v1447
    %v1544 = vmul.f32 %v1528, %v1432
    %v1545 = vmul.f32 %v1529, %v1433
    %v1546 = vmul.f32 %v1530, %v1434
    %v1547 = vmul.f32 %v1531, %v1435
    %v1548 = vmul.f32 %v1532, %v1436
    %v1549 = vmul.f32 %v1533, %v1437
    %v1550 = vmul.f32 %v1534, %v1438
    %v1551 = vmul.f32 %v1535, %v1439
    %v1552 = vmul.f32 %v1536, %v1440
    %v1553 = vmul.f32 %v1537, %v1441
    %v1554 = vmul.f32 %v1538, %v1442
    %v1555 = vmul.f32 %v1539, %v1443
    %v1556 = vmul.f32 %v1540, %v1444
    %v1557 = vmul.f32 %v1541, %v1445
    %v1558 = vmul.f32 %v1542, %v1446
    %v1559 = vmul.f32 %v1543, %v1447
    %v1560 = vsub.f32 1.0, %v1496
    %v1561 = vsub.f32 1.0, %v1497
    %v1562 = vsub.f32 1.0, %v1498
    %v1563 = vsub.f32 1.0, %v1499
    %v1564 = vsub.f32 1.0, %v1500
    %v1565 = vsub.f32 1.0, %v1501
    %v1566 = vsub.f32 1.0, %v1502
    %v1567 = vsub.f32 1.0, %v1503
    %v1568 = vsub.f32 1.0, %v1504
    %v1569 = vsub.f32 1.0, %v1505
    %v1570 = vsub.f32 1.0, %v1506
    %v1571 = vsub.f32 1.0, %v1507
    %v1572 = vsub.f32 1.0, %v1508
    %v1573 = vsub.f32 1.0, %v1509
    %v1574 = vsub.f32 1.0, %v1510
    %v1575 = vsub.f32 1.0, %v1511
    %v1576 = vsub.f32 %v1448, 0.5
    %v1577 = vsub.f32 %v1449, 0.5
    %v1578 = vsub.f32 %v1450, 0.5
    %v1579 = vsub.f32 %v1451, 0.5
    %v1580 = vsub.f32 %v1452, 0.5
    %v1581 = vsub.f32 %v1453, 0.5
    %v1582 = vsub.f32 %v1454, 0.5
    %v1583 = vsub.f32 %v1455, 0.5
    %v1584 = vsub.f32 %v1456, 0.5
    %v1585 = vsub.f32 %v1457, 0.5
    %v1586 = vsub.f32 %v1458, 0.5
    %v1587 = vsub.f32 %v1459, 0.5
    %v1588 = vsub.f32 %v1460, 0.5
    %v1589 = vsub.f32 %v1461, 0.5
    %v1590 = vsub.f32 %v1462, 0.5
    %v1591 = vsub.f32 %v1463, 0.5
    %v1592 = vmul.f32 %v1560, %v1576
    %v1593 = vmul.f32 %v1561, %v1577
    %v1594 = vmul.f32 %v1562, %v1578
    %v1595 = vmul.f32 %v1563, %v1579
    %v1596 = vmul.f32 %v1564, %v1580
    %v1597 = vmul.f32 %v1565, %v1581
    %v1598 = vmul.f32 %v1566, %v1582
    %v1599 = vmul.f32 %v1567, %v1583
    %v1600 = vmul.f32 %v1568, %v1584
    %v1601 = vmul.f32 %v1569, %v1585
    %v1602 = vmul.f32 %v1570, %v1586
    %v1603 = vmul.f32 %v1571, %v1587
    %v1604 = vmul.f32 %v1572, %v1588
    %v1605 = vmul.f32 %v1573, %v1589
    %v1606 = vmul.f32 %v1574, %v1590
    %v1607 = vmul.f32 %v1575, %v1591
    %v1608 = vadd.f32 %v1544, %v1592
    %v1609 = vadd.f32 %v1545, %v1593
    %v1610 = vadd.f32 %v1546, %v1594
    %v1611 = vadd.f32 %v1547, %v1595
    %v1612 = vadd.f32 %v1548, %v1596
    %v1613 = vadd.f32 %v1549, %v1597
    %v1614 = vadd.f32 %v1550, %v1598
    %v1615 = vadd.f32 %v1551, %v1599
    %v1616 = vadd.f32 %v1552, %v1600
    %v1617 = vadd.f32 %v1553, %v1601
    %v1618 = vadd.f32 %v1554, %v1602
    %v1619 = vadd.f32 %v1555, %v1603
    %v1620 = vadd.f32 %v1556, %v1604
    %v1621 = vadd.f32 %v1557, %v1605
    %v1622 = vadd.f32 %v1558, %v1606
    %v1623 = vadd.f32 %v1559, %v1607
    %1640 = vrot.lane.b32.xlu0 %v1608, 120
    %v1641 = vpop.permute.xlu0 %1640
    %1642 = vrot.lane.b32.xlu0 %v1609, 120
    %v1643 = vpop.permute.xlu0 %1642
    %1644 = vrot.lane.b32.xlu0 %v1610, 120
    %v1645 = vpop.permute.xlu0 %1644
    %1646 = vrot.lane.b32.xlu0 %v1611, 120
    %v1647 = vpop.permute.xlu0 %1646
    %1648 = vrot.lane.b32.xlu0 %v1612, 120
    %v1649 = vpop.permute.xlu0 %1648
    %1650 = vrot.lane.b32.xlu0 %v1613, 120
    %v1651 = vpop.permute.xlu0 %1650
    %1652 = vrot.lane.b32.xlu0 %v1614, 120
    %v1653 = vpop.permute.xlu0 %1652
    %1654 = vrot.lane.b32.xlu0 %v1615, 120
    %v1655 = vpop.permute.xlu0 %1654
    %1656 = vrot.lane.b32.xlu0 %v1616, 120
    %v1657 = vpop.permute.xlu0 %1656
    %1658 = vrot.lane.b32.xlu0 %v1617, 120
    %v1659 = vpop.permute.xlu0 %1658
    %1660 = vrot.lane.b32.xlu0 %v1618, 120
    %v1661 = vpop.permute.xlu0 %1660
    %1662 = vrot.lane.b32.xlu0 %v1619, 120
    %v1663 = vpop.permute.xlu0 %1662
    %1664 = vrot.lane.b32.xlu0 %v1620, 120
    %v1665 = vpop.permute.xlu0 %1664
    %1666 = vrot.lane.b32.xlu0 %v1621, 120
    %v1667 = vpop.permute.xlu0 %1666
    %1668 = vrot.lane.b32.xlu0 %v1622, 120
    %v1669 = vpop.permute.xlu0 %1668
    %1670 = vrot.lane.b32.xlu0 %v1623, 120
    %v1671 = vpop.permute.xlu0 %1670
    %vm1688 = vcmask 162816
    %v1689 = vsel %vm1688, %v1641, 0.0
    %v1690 = vsel %vm1688, %v1643, 0.0
    %v1691 = vadd.f32 %v1689, %v1690
    %v1692 = vsel %vm1688, %v1645, 0.0
    %v1693 = vadd.f32 %v1691, %v1692
    %v1694 = vsel %vm1688, %v1647, 0.0
    %v1695 = vadd.f32 %v1693, %v1694
    %v1696 = vsel %vm1688, %v1649, 0.0
    %v1697 = vadd.f32 %v1695, %v1696
    %v1698 = vsel %vm1688, %v1651, 0.0
    %v1699 = vadd.f32 %v1697, %v1698
    %v1700 = vsel %vm1688, %v1653, 0.0
    %v1701 = vadd.f32 %v1699, %v1700
    %v1702 = vsel %vm1688, %v1655, 0.0
    %v1703 = vadd.f32 %v1701, %v1702
    %v1704 = vsel %vm1688, %v1657, 0.0
    %v1705 = vadd.f32 %v1703, %v1704
    %v1706 = vsel %vm1688, %v1659, 0.0
    %v1707 = vadd.f32 %v1705, %v1706
    %v1708 = vsel %vm1688, %v1661, 0.0
    %v1709 = vadd.f32 %v1707, %v1708
    %v1710 = vsel %vm1688, %v1663, 0.0
    %v1711 = vadd.f32 %v1709, %v1710
    %v1712 = vsel %vm1688, %v1665, 0.0
    %v1713 = vadd.f32 %v1711, %v1712
    %v1714 = vsel %vm1688, %v1667, 0.0
    %v1715 = vadd.f32 %v1713, %v1714
    %v1716 = vsel %vm1688, %v1669, 0.0
    %v1717 = vadd.f32 %v1715, %v1716
    %v1718 = vsel %vm1688, %v1671, 0.0
    %v1719 = vadd.f32 %v1717, %v1718
    %1720 = vadd.xlane.f32.xlu0 %v1719
    %v1721 = vpop.xlane.xlu0 %1720
    %v1722 = vrot.slane %v1721, 4
    %v1723 = vadd.f32 %v1721, %v1722
    %v1724 = vrot.slane %v1723, 2
    %v1725 = vadd.f32 %v1723, %v1724
    %v1726 = vrot.slane %v1725, 1
    %v1727 = vadd.f32 %v1725, %v1726
    %s1728 = vtos %v1727
    %s1729 = smul.f32 %s1728, %s166
    %s1730 = sadd.f32 %s820, %s634
    %s1731 = sadd.f32 %s1730, %s1729
    %s1732 = sadd.f32 %s1731, %s1351
    %s1733 = scalar_lea.smem [#allocation2], 0
    %1734 = sst [smem:[%s1733]] %s820
    %s1735 = scalar_lea.smem [#allocation2], 1
    %1736 = sst [smem:[%s1735]] %s634
    %s1737 = scalar_lea.smem [#allocation2], 2
    %1738 = sst [smem:[%s1737]] %s1729
    %s1739 = scalar_lea.smem [#allocation2], 3
    %1740 = sst [smem:[%s1739]] %s1351
    %s1741 = scalar_lea.smem [#allocation2], 4
    %1742 = sst [smem:[%s1741]] %s1732
    %s1743 = scalar_lea.smem [#allocation2], 5
    %1744 = sst [smem:[%s1743]] 0.0
    %s1745 = scalar_lea.smem [#allocation2], 6
    %1746 = sst [smem:[%s1745]] 0.0
    %s1747 = scalar_lea.smem [#allocation2], 7
    %1748 = sst [smem:[%s1747]] 0.0
    // Predicated region
    $region10: #{train_helper_forward.1} parent=1 // pred_check
      _
    $region11: #{train_helper_forward.1} parent=1 // pred_check_branch
      %1750 = sbr.rel (0) target = $region13
    $region12: #{train_helper_forward.1} parent=1 // pred_region
      %s1752 = ssub.s32 16, 16
      %1753 = vsyncadd [#allocation3], %s1752
      %s1755 = sshll.u32 %s2, 4
      %s1756 = int_to_ptr.vmem [resolvable:$true] %s1755
      %1758 = dma.smem_to_vmem [#allocation2], 16, %s1756, [#allocation3]
    $region13: #{train_helper_forward.1} parent=1 // pred_fallthru
      _
    // Predicated region
    $region14: #{train_helper_forward.1} parent=1 // pred_check
      _
    $region15: #{train_helper_forward.1} parent=1 // pred_check_branch
      %1760 = sbr.rel (0) target = $region17
    $region16: #{train_helper_forward.1} parent=1 // pred_region
      %1761 = dma.done [#allocation3], 16
    $region17: #{train_helper_forward.1} parent=1 // pred_fallthru
      _
    %1762 = sfence
    %1763 = vsyncpa [#allocation3], 1

</llo_original>
